<compile_context>
chip_gen: v7x
topology: tpu7x:2x2x1
jax: 0.10.0
libtpu: 0.0.40
codegen_flags: <defaults>
</compile_context>

<pallas_src>
import functools

import jax
import jax.numpy as jnp
from jax.experimental import pallas as pl
from jax.experimental.pallas import tpu as pltpu


# ----------------------------- in-kernel helpers -----------------------------

def _layernorm(x, w, b, eps=1e-5):
    # x: (R, C) f32; w, b: (1, C) f32
    mu = jnp.mean(x, axis=-1, keepdims=True)
    xc = x - mu
    var = jnp.mean(xc * xc, axis=-1, keepdims=True)
    return xc * jax.lax.rsqrt(var + eps) * w + b


def _gelu(x):
    # TODO(synk): torch nn.GELU default is exact erf GELU; erf has no reliable
    # Pallas TPU lowering, so the tanh approximation is used (diff ~1e-3).
    c = 0.7978845608028654  # sqrt(2/pi)
    return 0.5 * x * (1.0 + jnp.tanh(c * (x + 0.044715 * x * x * x)))


def _softmax(a):
    a = a - jnp.max(a, axis=-1, keepdims=True)
    e = jnp.exp(a)
    denom = jnp.sum(e, axis=-1, keepdims=True)
    return e * pl.reciprocal(denom, approx=True)


def _mha_heads(q_all, k_all, v_all, bt, m, n, num_heads):
    """Per-head score/softmax/PV on bf16 (R, C) slabs; returns (bt*m, C) bf16.

    The QKV and output projections are single lane-dense matmuls outside this
    helper; only the inherently per-head part lives here.
    q_all: (bt*m, C) bf16; k_all, v_all: (bt*n, C) bf16.
    """
    C = q_all.shape[-1]
    D = C // num_heads
    outs = []
    for h in range(num_heads):                      # static unroll, H is small
        qh = q_all[:, h * D:(h + 1) * D].reshape(bt, m, D)
        kh = k_all[:, h * D:(h + 1) * D].reshape(bt, n, D)
        vh = v_all[:, h * D:(h + 1) * D].reshape(bt, n, D)
        s = jnp.einsum('bqd,bkd->bqk', qh, kh,
                       preferred_element_type=jnp.float32)      # (bt, m, n) f32
        p = _softmax(s).astype(jnp.bfloat16)
        oh = jnp.einsum('bqk,bkd->bqd', p, vh,
                        preferred_element_type=jnp.float32)     # (bt, m, D) f32
        outs.append(oh.reshape(bt * m, D).astype(jnp.bfloat16))
    return outs[0] if num_heads == 1 else jnp.concatenate(outs, axis=-1)


def _mlp(x_f32, fc1w, fc1b, fc2w, fc2b):
    h = jnp.dot(x_f32.astype(jnp.bfloat16), fc1w,
                preferred_element_type=jnp.float32) + fc1b
    h = _gelu(h)
    return jnp.dot(h.astype(jnp.bfloat16), fc2w,
                   preferred_element_type=jnp.float32) + fc2b


# ------------------------------ local Block kernel ----------------------------

def local_block_kernel(x_ref,
                       ln1w, ln1b, wqkv, bq, wproj, bproj,
                       ln2w, ln2b, fc1w, fc1b, fc2w, fc2b,
                       o_ref, *, tokens_per_batch, num_heads):
    # TODO(synk): attn_mask branch not implemented (forward is called with mask=None).
    n = tokens_per_batch
    x = x_ref[...].astype(jnp.float32)              # (Bt*N, C) residual stream, f32
    R, C = x.shape
    bt = R // n

    xn_bf = _layernorm(x, ln1w[...], ln1b[...]).astype(jnp.bfloat16)

    # Fused QKV: one lane-dense (R, C) @ (C, 3C) matmul on the whole slab.
    qkv = jnp.dot(xn_bf, wqkv[...], preferred_element_type=jnp.float32)
    q_all = (qkv[:, :C] + bq[...]).astype(jnp.bfloat16)   # scale+bias folded on host
    k_all = qkv[:, C:2 * C].astype(jnp.bfloat16)          # K bias cancels in softmax
    v_all = qkv[:, 2 * C:].astype(jnp.bfloat16)           # V bias folded into bproj

    o_bf = _mha_heads(q_all, k_all, v_all, bt, n, n, num_heads)   # (R, C) bf16

    # Head concat folded into a single (R, C) @ (C, C) output projection.
    x = x + jnp.dot(o_bf, wproj[...], preferred_element_type=jnp.float32) + bproj[...]
    xn2 = _layernorm(x, ln2w[...], ln2b[...])
    x = x + _mlp(xn2, fc1w[...], fc1b[...], fc2w[...], fc2b[...])
    o_ref[...] = x.astype(o_ref.dtype)


# ----------------------------- global CrossBlock kernel -----------------------

def cross_block_kernel(q_ref, y_ref,
                       ln1w, ln1b, wq, bq, wkv, wproj, bproj,
                       ln2w, ln2b, fc1w, fc1b, fc2w, fc2b,
                       o_ref, *, q_tokens, kv_tokens, num_heads):
    m, n = q_tokens, kv_tokens
    xq = q_ref[...].astype(jnp.float32)             # (Bt*M, C) query tokens
    y = y_ref[...].astype(jnp.float32)              # (Bt*N, C) key/value tokens
    Rq, C = xq.shape
    bt = Rq // m

    # CrossBlock applies the SAME norm1 to both query (x) and context (y).
    xn_bf = _layernorm(xq, ln1w[...], ln1b[...]).astype(jnp.bfloat16)
    yn_bf = _layernorm(y, ln1w[...], ln1b[...]).astype(jnp.bfloat16)

    q_all = (jnp.dot(xn_bf, wq[...], preferred_element_type=jnp.float32)
             + bq[...]).astype(jnp.bfloat16)                      # (Rq, C)
    kv = jnp.dot(yn_bf, wkv[...], preferred_element_type=jnp.float32)  # (Rkv, 2C)
    k_all = kv[:, :C].astype(jnp.bfloat16)          # K bias cancels in softmax
    v_all = kv[:, C:].astype(jnp.bfloat16)          # V bias folded into bproj

    o_bf = _mha_heads(q_all, k_all, v_all, bt, m, n, num_heads)   # (Rq, C) bf16

    x = xq + jnp.dot(o_bf, wproj[...], preferred_element_type=jnp.float32) + bproj[...]
    xn2 = _layernorm(x, ln2w[...], ln2b[...])
    x = x + _mlp(xn2, fc1w[...], fc1b[...], fc2w[...], fc2b[...])
    o_ref[...] = x.astype(o_ref.dtype)


# ------------------------- host-side parameter preparation ---------------------

_LOCAL_KEYS = ("ln1_w", "ln1_b", "wqkv", "bq", "wproj", "bproj",
               "ln2_w", "ln2_b", "fc1_w", "fc1_b", "fc2_w", "fc2_b")
_CROSS_KEYS = ("ln1_w", "ln1_b", "wq", "bq", "wkv", "wproj", "bproj",
               "ln2_w", "ln2_b", "fc1_w", "fc1_b", "fc2_w", "fc2_b")


def prep_local_params(p, H):
    """Canonical f32 params -> kernel layout (scale/bias folded, bf16 weights)."""
    C = p["qkv_w"].shape[0]
    D = C // H
    scale = D ** -0.5
    qkv_w, qkv_b = p["qkv_w"], p["qkv_b"][0]
    wqkv = jnp.concatenate([qkv_w[:, :C] * scale, qkv_w[:, C:]], axis=1)
    bq = (qkv_b[:C] * scale).reshape(1, C)
    bv = qkv_b[2 * C:].reshape(1, C)
    bproj = p["proj_b"] + bv @ p["proj_w"]          # V bias folded into proj bias
    return dict(
        ln1_w=p["ln1_w"], ln1_b=p["ln1_b"],
        wqkv=wqkv.astype(jnp.bfloat16), bq=bq,
        wproj=p["proj_w"].astype(jnp.bfloat16), bproj=bproj,
        ln2_w=p["ln2_w"], ln2_b=p["ln2_b"],
        fc1_w=p["fc1_w"].astype(jnp.bfloat16), fc1_b=p["fc1_b"],
        fc2_w=p["fc2_w"].astype(jnp.bfloat16), fc2_b=p["fc2_b"],
    )


def prep_cross_params(p, H):
    C = p["q_w"].shape[0]
    D = C // H
    scale = D ** -0.5
    kv_b = p["kv_b"][0]
    bv = kv_b[C:].reshape(1, C)
    bproj = p["proj_b"] + bv @ p["proj_w"]
    return dict(
        ln1_w=p["ln1_w"], ln1_b=p["ln1_b"],
        wq=(p["q_w"] * scale).astype(jnp.bfloat16), bq=p["q_b"] * scale,
        wkv=p["kv_w"].astype(jnp.bfloat16),
        wproj=p["proj_w"].astype(jnp.bfloat16), bproj=bproj,
        ln2_w=p["ln2_w"], ln2_b=p["ln2_b"],
        fc1_w=p["fc1_w"].astype(jnp.bfloat16), fc1_b=p["fc1_b"],
        fc2_w=p["fc2_w"].astype(jnp.bfloat16), fc2_b=p["fc2_b"],
    )


def prepare_recon_params(local_params, global_params, num_heads):
    """Hoisted weight prep: split/scale/cast once, reuse across forward calls."""
    return ([prep_local_params(p, num_heads) for p in local_params],
            [prep_cross_params(p, num_heads) for p in global_params])


# ------------------------------- pallas_call wrappers --------------------------

@functools.lru_cache(maxsize=1)
def _tpu_vmem_capacity():
    try:
        return int(pltpu.get_tpu_info().vmem_capacity_bytes)
    except Exception:
        return 64 << 20   # conservative (v7x-sized) fallback


def _param_specs(params):
    # Weights live whole in VMEM: single-buffered, resident across all grid
    # steps (no double-buffering, no per-step re-DMA).
    return [pl.BlockSpec(memory_space=pltpu.MemorySpace.VMEM) for _ in params]


def _pick_bt(batch, rows_list, channels, cap):
    """Batch-tile size (divisor of `batch`), generation aware."""
    if cap >= 100 << 20:          # v5e / v6e: 128 MiB VMEM, 1 TC -> big tiles
        target_rows, max_act, want_two_steps = 512, 16 << 20, False
    else:                         # v7x-ish: 64 MiB VMEM, 2 TCs -> >=2 grid steps
        target_rows, max_act, want_two_steps = 256, 6 << 20, True
    rows_sum = sum(rows_list)
    divisors = [d for d in range(1, batch + 1) if batch % d == 0]
    # Mosaic block constraint: the 2nd-minor block dim must be a multiple of 8
    # unless the block spans the whole array.
    cands = [d for d in divisors
             if d == batch or all((d * r) % 8 == 0 for r in rows_list)]
    bt = cands[0]
    for d in cands:
        if d * rows_sum * channels * 4 > max_act and d != cands[0]:
            break
        bt = d
        if d * rows_sum >= target_rows:
            break
    if want_two_steps and batch >= 2 and bt == batch:
        smaller = [d for d in cands if d < batch]
        if smaller:
            bt = smaller[-1]      # keep both TensorCores busy on v7x
    return bt


def _tmp_bytes(r_q, r_kv, C, hidden, bt, n_q, n_kv):
    """Generous estimate of the in-kernel f32/bf16 temporaries."""
    f32, bf16 = 4, 2
    proj = r_kv * 3 * C * (f32 + bf16)              # fused QKV / KV+Q outputs
    scores = 2 * bt * n_q * n_kv * (f32 + bf16)     # per-head scores + probs
    attn = 2 * r_q * C * (f32 + bf16)               # head outputs, concat, proj out
    resid = 4 * r_q * C * f32 + 2 * r_kv * C * f32  # residual stream / LN temps
    mlp = r_q * hidden * (f32 + bf16)               # MLP hidden
    return proj + scores + attn + resid + mlp


def _vmem_limit(params, act_bytes, tmp_bytes, cap):
    param_bytes = sum(int(w.size) * w.dtype.itemsize for w in params)
    # Weights single-buffered (VMEM-resident); activation blocks double-buffered
    # by the pipeline; temporaries estimated explicitly; small margin.
    need = param_bytes + 2 * act_bytes + tmp_bytes + (4 << 20)
    return int(min(max(need, 32 << 20), int(cap * 0.9)))


def run_local_block(x, kp, num_heads):
    B, N, C = x.shape
    cap = _tpu_vmem_capacity()
    bt = _pick_bt(B, [N], C, cap)
    params = [kp[k] for k in _LOCAL_KEYS]
    hidden = kp["fc1_w"].shape[1]
    R = bt * N
    xf = x.reshape(B * N, C)
    out = pl.pallas_call(
        functools.partial(local_block_kernel, tokens_per_batch=N,
                          num_heads=num_heads),
        out_shape=jax.ShapeDtypeStruct((B * N, C), x.dtype),
        grid=(B // bt,),
        in_specs=[pl.BlockSpec((bt * N, C), lambda i: (i, 0))] + _param_specs(params),
        out_specs=pl.BlockSpec((bt * N, C), lambda i: (i, 0)),
        compiler_params=pltpu.CompilerParams(
            dimension_semantics=("parallel",),
            vmem_limit_bytes=_vmem_limit(
                params, 2 * R * C * 4,
                _tmp_bytes(R, R, C, hidden, bt, N, N), cap)),
    )(xf, *params)
    return out.reshape(B, N, C)


def run_cross_block(query, y, kp, num_heads):
    B, M, C = query.shape
    _, N, _ = y.shape
    cap = _tpu_vmem_capacity()
    bt = _pick_bt(B, [M, N], C, cap)
    params = [kp[k] for k in _CROSS_KEYS]
    hidden = kp["fc1_w"].shape[1]
    Rq, Rkv = bt * M, bt * N
    qf = query.reshape(B * M, C)
    yf = y.reshape(B * N, C)
    out = pl.pallas_call(
        functools.partial(cross_block_kernel, q_tokens=M, kv_tokens=N,
                          num_heads=num_heads),
        out_shape=jax.ShapeDtypeStruct((B * M, C), query.dtype),
        grid=(B // bt,),
        in_specs=[pl.BlockSpec((bt * M, C), lambda i: (i, 0)),
                  pl.BlockSpec((bt * N, C), lambda i: (i, 0))] + _param_specs(params),
        out_specs=pl.BlockSpec((bt * M, C), lambda i: (i, 0)),
        compiler_params=pltpu.CompilerParams(
            dimension_semantics=("parallel",),
            vmem_limit_bytes=_vmem_limit(
                params, (2 * Rq + Rkv) * C * 4,
                _tmp_bytes(Rq, Rkv, C, hidden, bt, M, N), cap)),
    )(qf, yf, *params)
    return out.reshape(B, M, C)


def recon_blocks_forward(x, pos, query, local_params, global_params, num_heads,
                         every_layer_add_pos=True, prepared=False):
    """ReConBlocks.forward (attn_mask=None).

    Pass prepared=True with the output of prepare_recon_params to avoid
    re-splitting / re-casting weights on every forward call.
    """
    if prepared:
        lks, gks = local_params, global_params
    else:
        lks, gks = prepare_recon_params(local_params, global_params, num_heads)
    depth = len(lks)
    if not every_layer_add_pos:
        x = x + pos
    for i in range(depth):
        xi = x + pos if every_layer_add_pos else x
        x = run_local_block(xi, lks[i], num_heads)
        if query is not None:
            query = run_cross_block(query, x, gks[i], num_heads)
    return x, query


# ------------------------------- parameter init --------------------------------

def _randn(key, shape, scale=0.02):
    return (scale * jax.random.normal(key, shape)).astype(jnp.float32)


def init_local_block(key, C, hidden):
    ks = jax.random.split(key, 8)
    return dict(
        ln1_w=jnp.ones((1, C), jnp.float32), ln1_b=jnp.zeros((1, C), jnp.float32),
        qkv_w=_randn(ks[0], (C, 3 * C)), qkv_b=_randn(ks[1], (1, 3 * C)),
        proj_w=_randn(ks[2], (C, C)), proj_b=_randn(ks[3], (1, C)),
        ln2_w=jnp.ones((1, C), jnp.float32), ln2_b=jnp.zeros((1, C), jnp.float32),
        fc1_w=_randn(ks[4], (C, hidden)), fc1_b=_randn(ks[5], (1, hidden)),
        fc2_w=_randn(ks[6], (hidden, C)), fc2_b=_randn(ks[7], (1, C)),
    )


def init_cross_block(key, C, hidden):
    ks = jax.random.split(key, 10)
    return dict(
        ln1_w=jnp.ones((1, C), jnp.float32), ln1_b=jnp.zeros((1, C), jnp.float32),
        q_w=_randn(ks[0], (C, C)), q_b=_randn(ks[1], (1, C)),
        kv_w=_randn(ks[2], (C, 2 * C)), kv_b=_randn(ks[3], (1, 2 * C)),
        proj_w=_randn(ks[4], (C, C)), proj_b=_randn(ks[5], (1, C)),
        ln2_w=jnp.ones((1, C), jnp.float32), ln2_b=jnp.zeros((1, C), jnp.float32),
        fc1_w=_randn(ks[6], (C, hidden)), fc1_b=_randn(ks[7], (1, hidden)),
        fc2_w=_randn(ks[8], (hidden, C)), fc2_b=_randn(ks[9], (1, C)),
    )


# --------------------------- pure-JAX reference (check) ------------------------

def _ref_ln(x, w, b, eps=1e-5):
    mu = x.mean(-1, keepdims=True)
    var = ((x - mu) ** 2).mean(-1, keepdims=True)
    return (x - mu) / jnp.sqrt(var + eps) * w + b


def _ref_mha(q, k, v, H):
    B, Nq, C = q.shape
    Nk = k.shape[1]
    D = C // H
    qh = q.reshape(B, Nq, H, D).transpose(0, 2, 1, 3) * (D ** -0.5)
    kh = k.reshape(B, Nk, H, D).transpose(0, 2, 1, 3)
    vh = v.reshape(B, Nk, H, D).transpose(0, 2, 1, 3)
    a = jax.nn.softmax(qh @ jnp.swapaxes(kh, -1, -2), axis=-1)
    return (a @ vh).transpose(0, 2, 1, 3).reshape(B, Nq, C)


def _ref_local(x, p, H):
    C = x.shape[-1]
    xn = _ref_ln(x, p["ln1_w"][0], p["ln1_b"][0])
    qkv = xn @ p["qkv_w"] + p["qkv_b"][0]
    o = _ref_mha(qkv[..., :C], qkv[..., C:2 * C], qkv[..., 2 * C:], H)
    x = x + o @ p["proj_w"] + p["proj_b"][0]
    h = _gelu(_ref_ln(x, p["ln2_w"][0], p["ln2_b"][0]) @ p["fc1_w"] + p["fc1_b"][0])
    return x + h @ p["fc2_w"] + p["fc2_b"][0]


def _ref_cross(q, y, p, H):
    C = q.shape[-1]
    qn = _ref_ln(q, p["ln1_w"][0], p["ln1_b"][0])
    yn = _ref_ln(y, p["ln1_w"][0], p["ln1_b"][0])
    qq = qn @ p["q_w"] + p["q_b"][0]
    kv = yn @ p["kv_w"] + p["kv_b"][0]
    o = _ref_mha(qq, kv[..., :C], kv[..., C:], H)
    x = q + o @ p["proj_w"] + p["proj_b"][0]
    h = _gelu(_ref_ln(x, p["ln2_w"][0], p["ln2_b"][0]) @ p["fc1_w"] + p["fc1_b"][0])
    return x + h @ p["fc2_w"] + p["fc2_b"][0]


def _ref_forward(x, pos, query, lps, gps, H):
    for i in range(len(lps)):
        x = _ref_local(x + pos, lps[i], H)
        query = _ref_cross(query, x, gps[i], H)
    return x, query


# ------------------------------------ main --------------------------------------

if __name__ == "__main__":
    B, N, M, C, H, depth = 2, 8, 4, 32, 4, 2
    hidden = int(C * 4.0)

    root = jax.random.PRNGKey(0)
    kx, kpos, kq, kparams = jax.random.split(root, 4)
    x = jax.random.normal(kx, (B, N, C), jnp.float32)
    pos = jax.random.normal(kpos, (B, N, C), jnp.float32)
    query = jax.random.normal(kq, (B, M, C), jnp.float32)

    local_params = [init_local_block(jax.random.fold_in(kparams, 2 * i), C, hidden)
                    for i in range(depth)]
    global_params = [init_cross_block(jax.random.fold_in(kparams, 2 * i + 1), C, hidden)
                     for i in range(depth)]

    # Weight prep hoisted out of the forward (done once, reused across calls).
    lks, gks = prepare_recon_params(local_params, global_params, H)

    x_out, q_out = recon_blocks_forward(x, pos, query, lks, gks, H, prepared=True)
    x_out = jax.block_until_ready(x_out)
    q_out = jax.block_until_ready(q_out)

    x_ref, q_ref = _ref_forward(x, pos, query, local_params, global_params, H)
    # bf16 matmul operands in the kernel vs f32 reference -> loosened tolerance.
    assert jnp.allclose(x_out, x_ref, atol=3e-2, rtol=3e-2), "x mismatch"
    assert jnp.allclose(q_out, q_ref, atol=3e-2, rtol=3e-2), "query mismatch"

    print("KERNEL_OK")
</pallas_src>

<mosaic_0001>
module attributes {stable_mosaic.version = 11 : i64} {
  func.func @local_block_kernel(%arg0: i32, %arg1: memref<8x32xf32, #tpu.memory_space<vmem>>, %arg2: memref<1x32xf32, #tpu.memory_space<vmem>>, %arg3: memref<1x32xf32, #tpu.memory_space<vmem>>, %arg4: memref<32x96xbf16, #tpu.memory_space<vmem>>, %arg5: memref<1x32xf32, #tpu.memory_space<vmem>>, %arg6: memref<32x32xbf16, #tpu.memory_space<vmem>>, %arg7: memref<1x32xf32, #tpu.memory_space<vmem>>, %arg8: memref<1x32xf32, #tpu.memory_space<vmem>>, %arg9: memref<1x32xf32, #tpu.memory_space<vmem>>, %arg10: memref<32x128xbf16, #tpu.memory_space<vmem>>, %arg11: memref<1x128xf32, #tpu.memory_space<vmem>>, %arg12: memref<128x32xbf16, #tpu.memory_space<vmem>>, %arg13: memref<1x32xf32, #tpu.memory_space<vmem>>, %arg14: memref<8x32xf32, #tpu.memory_space<vmem>>) attributes {dimension_semantics = [#tpu.dimension_semantics<parallel>], iteration_bounds = array<i64: 2>, scalar_prefetch = 0 : i64, scratch_operands = 0 : i64, tpu.core_type = #tpu.core_type<tc>, window_params = [{transform_indices = @transform_0, window_bounds = array<i64: 8, 32>}, {pipeline_mode = #tpu.pipeline_mode<synchronous>, transform_indices = @transform_1, window_bounds = array<i64: 1, 32>}, {pipeline_mode = #tpu.pipeline_mode<synchronous>, transform_indices = @transform_2, window_bounds = array<i64: 1, 32>}, {pipeline_mode = #tpu.pipeline_mode<synchronous>, transform_indices = @transform_3, window_bounds = array<i64: 32, 96>}, {pipeline_mode = #tpu.pipeline_mode<synchronous>, transform_indices = @transform_4, window_bounds = array<i64: 1, 32>}, {pipeline_mode = #tpu.pipeline_mode<synchronous>, transform_indices = @transform_5, window_bounds = array<i64: 32, 32>}, {pipeline_mode = #tpu.pipeline_mode<synchronous>, transform_indices = @transform_6, window_bounds = array<i64: 1, 32>}, {pipeline_mode = #tpu.pipeline_mode<synchronous>, transform_indices = @transform_7, window_bounds = array<i64: 1, 32>}, {pipeline_mode = #tpu.pipeline_mode<synchronous>, transform_indices = @transform_8, window_bounds = array<i64: 1, 32>}, {pipeline_mode = #tpu.pipeline_mode<synchronous>, transform_indices = @transform_9, window_bounds = array<i64: 32, 128>}, {pipeline_mode = #tpu.pipeline_mode<synchronous>, transform_indices = @transform_10, window_bounds = array<i64: 1, 128>}, {pipeline_mode = #tpu.pipeline_mode<synchronous>, transform_indices = @transform_11, window_bounds = array<i64: 128, 32>}, {pipeline_mode = #tpu.pipeline_mode<synchronous>, transform_indices = @transform_12, window_bounds = array<i64: 1, 32>}, {transform_indices = @transform_13, window_bounds = array<i64: 8, 32>}]} {
    %c0 = arith.constant 0 : index
    %c0_0 = arith.constant 0 : index
    %0 = vector.load %arg1[%c0, %c0_0] : memref<8x32xf32, #tpu.memory_space<vmem>>, vector<8x32xf32>
    %c0_1 = arith.constant 0 : index
    %c0_2 = arith.constant 0 : index
    %1 = vector.load %arg2[%c0_1, %c0_2] : memref<1x32xf32, #tpu.memory_space<vmem>>, vector<1x32xf32>
    %c0_3 = arith.constant 0 : index
    %c0_4 = arith.constant 0 : index
    %2 = vector.load %arg3[%c0_3, %c0_4] : memref<1x32xf32, #tpu.memory_space<vmem>>, vector<1x32xf32>
    %cst = arith.constant dense<0.000000e+00> : vector<8xf32>
    %3 = vector.multi_reduction <add>, %0, %cst [1] : vector<8x32xf32> to vector<8xf32>
    %4 = vector.shape_cast %3 : vector<8xf32> to vector<8x1xf32>
    %cst_5 = arith.constant 3.200000e+01 : f32
    %5 = vector.broadcast %cst_5 : f32 to vector<8x1xf32>
    %6 = arith.divf %4, %5 : vector<8x1xf32>
    %7 = vector.broadcast %6 : vector<8x1xf32> to vector<8x32xf32>
    %8 = arith.subf %0, %7 : vector<8x32xf32>
    %9 = arith.mulf %8, %8 : vector<8x32xf32>
    %cst_6 = arith.constant dense<0.000000e+00> : vector<8xf32>
    %10 = vector.multi_reduction <add>, %9, %cst_6 [1] : vector<8x32xf32> to vector<8xf32>
    %11 = vector.shape_cast %10 : vector<8xf32> to vector<8x1xf32>
    %cst_7 = arith.constant 3.200000e+01 : f32
    %12 = vector.broadcast %cst_7 : f32 to vector<8x1xf32>
    %13 = arith.divf %11, %12 : vector<8x1xf32>
    %cst_8 = arith.constant 9.99999974E-6 : f32
    %14 = vector.broadcast %cst_8 : f32 to vector<8x1xf32>
    %15 = arith.addf %13, %14 : vector<8x1xf32>
    %16 = math.rsqrt %15 : vector<8x1xf32>
    %17 = vector.broadcast %16 : vector<8x1xf32> to vector<8x32xf32>
    %18 = arith.mulf %8, %17 : vector<8x32xf32>
    %19 = vector.broadcast %1 : vector<1x32xf32> to vector<8x32xf32>
    %20 = arith.mulf %18, %19 : vector<8x32xf32>
    %21 = vector.broadcast %2 : vector<1x32xf32> to vector<8x32xf32>
    %22 = arith.addf %20, %21 : vector<8x32xf32>
    %23 = arith.truncf %22 : vector<8x32xf32> to vector<8x32xbf16>
    %c0_9 = arith.constant 0 : index
    %c0_10 = arith.constant 0 : index
    %24 = vector.load %arg4[%c0_9, %c0_10] : memref<32x96xbf16, #tpu.memory_space<vmem>>, vector<32x96xbf16>
    %cst_11 = arith.constant dense<0.000000e+00> : vector<8x96xf32>
    %25 = tpu.matmul %23, %24, %cst_11 {dimension_numbers = #tpu.dot_dimension_numbers<[1], [0], [0], [1], [0, 0, 1, 1], [], []>} : vector<8x32xbf16>, vector<32x96xbf16>, vector<8x96xf32> -> vector<8x96xf32>
    %26 = vector.extract_strided_slice %25 {offsets = [0, 0], sizes = [8, 32], strides = [1, 1]} : vector<8x96xf32> to vector<8x32xf32>
    %c0_12 = arith.constant 0 : index
    %c0_13 = arith.constant 0 : index
    %27 = vector.load %arg5[%c0_12, %c0_13] : memref<1x32xf32, #tpu.memory_space<vmem>>, vector<1x32xf32>
    %28 = vector.broadcast %27 : vector<1x32xf32> to vector<8x32xf32>
    %29 = arith.addf %26, %28 : vector<8x32xf32>
    %30 = arith.truncf %29 : vector<8x32xf32> to vector<8x32xbf16>
    %31 = vector.extract_strided_slice %25 {offsets = [0, 32], sizes = [8, 32], strides = [1, 1]} : vector<8x96xf32> to vector<8x32xf32>
    %32 = arith.truncf %31 : vector<8x32xf32> to vector<8x32xbf16>
    %33 = vector.extract_strided_slice %25 {offsets = [0, 64], sizes = [8, 32], strides = [1, 1]} : vector<8x96xf32> to vector<8x32xf32>
    %34 = arith.truncf %33 : vector<8x32xf32> to vector<8x32xbf16>
    %35 = vector.extract_strided_slice %30 {offsets = [0, 0], sizes = [8, 8], strides = [1, 1]} : vector<8x32xbf16> to vector<8x8xbf16>
    %36 = vector.shape_cast %35 : vector<8x8xbf16> to vector<1x8x8xbf16>
    %37 = vector.extract_strided_slice %32 {offsets = [0, 0], sizes = [8, 8], strides = [1, 1]} : vector<8x32xbf16> to vector<8x8xbf16>
    %38 = vector.shape_cast %37 : vector<8x8xbf16> to vector<1x8x8xbf16>
    %39 = vector.extract_strided_slice %34 {offsets = [0, 0], sizes = [8, 8], strides = [1, 1]} : vector<8x32xbf16> to vector<8x8xbf16>
    %40 = vector.shape_cast %39 : vector<8x8xbf16> to vector<1x8x8xbf16>
    "tpu.trace_start"() <{level = 10 : i32, message = "bqd,bkd->bqk"}> : () -> ()
    %cst_14 = arith.constant dense<0.000000e+00> : vector<1x8x8xf32>
    %41 = tpu.matmul %36, %38, %cst_14 {dimension_numbers = #tpu.dot_dimension_numbers<[2], [2], [1], [1], [0, 0, 0, 1, 1, 1], [0], [0]>} : vector<1x8x8xbf16>, vector<1x8x8xbf16>, vector<1x8x8xf32> -> vector<1x8x8xf32>
    "tpu.trace_stop"() : () -> ()
    %cst_15 = arith.constant dense<0xFF800000> : vector<1x8xf32>
    %42 = vector.multi_reduction <maximumf>, %41, %cst_15 [2] : vector<1x8x8xf32> to vector<1x8xf32>
    %43 = vector.shape_cast %42 : vector<1x8xf32> to vector<1x8x1xf32>
    %44 = vector.broadcast %43 : vector<1x8x1xf32> to vector<1x8x8xf32>
    %45 = arith.subf %41, %44 : vector<1x8x8xf32>
    %46 = math.exp %45 : vector<1x8x8xf32>
    %cst_16 = arith.constant dense<0.000000e+00> : vector<1x8xf32>
    %47 = vector.multi_reduction <add>, %46, %cst_16 [2] : vector<1x8x8xf32> to vector<1x8xf32>
    %48 = vector.shape_cast %47 : vector<1x8xf32> to vector<1x8x1xf32>
    %49 = tpu.reciprocal %48 {approx = true} : vector<1x8x1xf32> -> vector<1x8x1xf32>
    %50 = vector.broadcast %49 : vector<1x8x1xf32> to vector<1x8x8xf32>
    %51 = arith.mulf %46, %50 : vector<1x8x8xf32>
    %52 = arith.truncf %51 : vector<1x8x8xf32> to vector<1x8x8xbf16>
    "tpu.trace_start"() <{level = 10 : i32, message = "bqk,bkd->bqd"}> : () -> ()
    %cst_17 = arith.constant dense<0.000000e+00> : vector<1x8x8xf32>
    %53 = tpu.matmul %52, %40, %cst_17 {dimension_numbers = #tpu.dot_dimension_numbers<[2], [1], [1], [2], [0, 0, 0, 1, 1, 2], [0], [0]>} : vector<1x8x8xbf16>, vector<1x8x8xbf16>, vector<1x8x8xf32> -> vector<1x8x8xf32>
    "tpu.trace_stop"() : () -> ()
    %54 = vector.shape_cast %53 : vector<1x8x8xf32> to vector<8x8xf32>
    %55 = arith.truncf %54 : vector<8x8xf32> to vector<8x8xbf16>
    %56 = vector.extract_strided_slice %30 {offsets = [0, 8], sizes = [8, 8], strides = [1, 1]} : vector<8x32xbf16> to vector<8x8xbf16>
    %57 = vector.shape_cast %56 : vector<8x8xbf16> to vector<1x8x8xbf16>
    %58 = vector.extract_strided_slice %32 {offsets = [0, 8], sizes = [8, 8], strides = [1, 1]} : vector<8x32xbf16> to vector<8x8xbf16>
    %59 = vector.shape_cast %58 : vector<8x8xbf16> to vector<1x8x8xbf16>
    %60 = vector.extract_strided_slice %34 {offsets = [0, 8], sizes = [8, 8], strides = [1, 1]} : vector<8x32xbf16> to vector<8x8xbf16>
    %61 = vector.shape_cast %60 : vector<8x8xbf16> to vector<1x8x8xbf16>
    "tpu.trace_start"() <{level = 10 : i32, message = "bqd,bkd->bqk"}> : () -> ()
    %cst_18 = arith.constant dense<0.000000e+00> : vector<1x8x8xf32>
    %62 = tpu.matmul %57, %59, %cst_18 {dimension_numbers = #tpu.dot_dimension_numbers<[2], [2], [1], [1], [0, 0, 0, 1, 1, 1], [0], [0]>} : vector<1x8x8xbf16>, vector<1x8x8xbf16>, vector<1x8x8xf32> -> vector<1x8x8xf32>
    "tpu.trace_stop"() : () -> ()
    %cst_19 = arith.constant dense<0xFF800000> : vector<1x8xf32>
    %63 = vector.multi_reduction <maximumf>, %62, %cst_19 [2] : vector<1x8x8xf32> to vector<1x8xf32>
    %64 = vector.shape_cast %63 : vector<1x8xf32> to vector<1x8x1xf32>
    %65 = vector.broadcast %64 : vector<1x8x1xf32> to vector<1x8x8xf32>
    %66 = arith.subf %62, %65 : vector<1x8x8xf32>
    %67 = math.exp %66 : vector<1x8x8xf32>
    %cst_20 = arith.constant dense<0.000000e+00> : vector<1x8xf32>
    %68 = vector.multi_reduction <add>, %67, %cst_20 [2] : vector<1x8x8xf32> to vector<1x8xf32>
    %69 = vector.shape_cast %68 : vector<1x8xf32> to vector<1x8x1xf32>
    %70 = tpu.reciprocal %69 {approx = true} : vector<1x8x1xf32> -> vector<1x8x1xf32>
    %71 = vector.broadcast %70 : vector<1x8x1xf32> to vector<1x8x8xf32>
    %72 = arith.mulf %67, %71 : vector<1x8x8xf32>
    %73 = arith.truncf %72 : vector<1x8x8xf32> to vector<1x8x8xbf16>
    "tpu.trace_start"() <{level = 10 : i32, message = "bqk,bkd->bqd"}> : () -> ()
    %cst_21 = arith.constant dense<0.000000e+00> : vector<1x8x8xf32>
    %74 = tpu.matmul %73, %61, %cst_21 {dimension_numbers = #tpu.dot_dimension_numbers<[2], [1], [1], [2], [0, 0, 0, 1, 1, 2], [0], [0]>} : vector<1x8x8xbf16>, vector<1x8x8xbf16>, vector<1x8x8xf32> -> vector<1x8x8xf32>
    "tpu.trace_stop"() : () -> ()
    %75 = vector.shape_cast %74 : vector<1x8x8xf32> to vector<8x8xf32>
    %76 = arith.truncf %75 : vector<8x8xf32> to vector<8x8xbf16>
    %77 = vector.extract_strided_slice %30 {offsets = [0, 16], sizes = [8, 8], strides = [1, 1]} : vector<8x32xbf16> to vector<8x8xbf16>
    %78 = vector.shape_cast %77 : vector<8x8xbf16> to vector<1x8x8xbf16>
    %79 = vector.extract_strided_slice %32 {offsets = [0, 16], sizes = [8, 8], strides = [1, 1]} : vector<8x32xbf16> to vector<8x8xbf16>
    %80 = vector.shape_cast %79 : vector<8x8xbf16> to vector<1x8x8xbf16>
    %81 = vector.extract_strided_slice %34 {offsets = [0, 16], sizes = [8, 8], strides = [1, 1]} : vector<8x32xbf16> to vector<8x8xbf16>
    %82 = vector.shape_cast %81 : vector<8x8xbf16> to vector<1x8x8xbf16>
    "tpu.trace_start"() <{level = 10 : i32, message = "bqd,bkd->bqk"}> : () -> ()
    %cst_22 = arith.constant dense<0.000000e+00> : vector<1x8x8xf32>
    %83 = tpu.matmul %78, %80, %cst_22 {dimension_numbers = #tpu.dot_dimension_numbers<[2], [2], [1], [1], [0, 0, 0, 1, 1, 1], [0], [0]>} : vector<1x8x8xbf16>, vector<1x8x8xbf16>, vector<1x8x8xf32> -> vector<1x8x8xf32>
    "tpu.trace_stop"() : () -> ()
    %cst_23 = arith.constant dense<0xFF800000> : vector<1x8xf32>
    %84 = vector.multi_reduction <maximumf>, %83, %cst_23 [2] : vector<1x8x8xf32> to vector<1x8xf32>
    %85 = vector.shape_cast %84 : vector<1x8xf32> to vector<1x8x1xf32>
    %86 = vector.broadcast %85 : vector<1x8x1xf32> to vector<1x8x8xf32>
    %87 = arith.subf %83, %86 : vector<1x8x8xf32>
    %88 = math.exp %87 : vector<1x8x8xf32>
    %cst_24 = arith.constant dense<0.000000e+00> : vector<1x8xf32>
    %89 = vector.multi_reduction <add>, %88, %cst_24 [2] : vector<1x8x8xf32> to vector<1x8xf32>
    %90 = vector.shape_cast %89 : vector<1x8xf32> to vector<1x8x1xf32>
    %91 = tpu.reciprocal %90 {approx = true} : vector<1x8x1xf32> -> vector<1x8x1xf32>
    %92 = vector.broadcast %91 : vector<1x8x1xf32> to vector<1x8x8xf32>
    %93 = arith.mulf %88, %92 : vector<1x8x8xf32>
    %94 = arith.truncf %93 : vector<1x8x8xf32> to vector<1x8x8xbf16>
    "tpu.trace_start"() <{level = 10 : i32, message = "bqk,bkd->bqd"}> : () -> ()
    %cst_25 = arith.constant dense<0.000000e+00> : vector<1x8x8xf32>
    %95 = tpu.matmul %94, %82, %cst_25 {dimension_numbers = #tpu.dot_dimension_numbers<[2], [1], [1], [2], [0, 0, 0, 1, 1, 2], [0], [0]>} : vector<1x8x8xbf16>, vector<1x8x8xbf16>, vector<1x8x8xf32> -> vector<1x8x8xf32>
    "tpu.trace_stop"() : () -> ()
    %96 = vector.shape_cast %95 : vector<1x8x8xf32> to vector<8x8xf32>
    %97 = arith.truncf %96 : vector<8x8xf32> to vector<8x8xbf16>
    %98 = vector.extract_strided_slice %30 {offsets = [0, 24], sizes = [8, 8], strides = [1, 1]} : vector<8x32xbf16> to vector<8x8xbf16>
    %99 = vector.shape_cast %98 : vector<8x8xbf16> to vector<1x8x8xbf16>
    %100 = vector.extract_strided_slice %32 {offsets = [0, 24], sizes = [8, 8], strides = [1, 1]} : vector<8x32xbf16> to vector<8x8xbf16>
    %101 = vector.shape_cast %100 : vector<8x8xbf16> to vector<1x8x8xbf16>
    %102 = vector.extract_strided_slice %34 {offsets = [0, 24], sizes = [8, 8], strides = [1, 1]} : vector<8x32xbf16> to vector<8x8xbf16>
    %103 = vector.shape_cast %102 : vector<8x8xbf16> to vector<1x8x8xbf16>
    "tpu.trace_start"() <{level = 10 : i32, message = "bqd,bkd->bqk"}> : () -> ()
    %cst_26 = arith.constant dense<0.000000e+00> : vector<1x8x8xf32>
    %104 = tpu.matmul %99, %101, %cst_26 {dimension_numbers = #tpu.dot_dimension_numbers<[2], [2], [1], [1], [0, 0, 0, 1, 1, 1], [0], [0]>} : vector<1x8x8xbf16>, vector<1x8x8xbf16>, vector<1x8x8xf32> -> vector<1x8x8xf32>
    "tpu.trace_stop"() : () -> ()
    %cst_27 = arith.constant dense<0xFF800000> : vector<1x8xf32>
    %105 = vector.multi_reduction <maximumf>, %104, %cst_27 [2] : vector<1x8x8xf32> to vector<1x8xf32>
    %106 = vector.shape_cast %105 : vector<1x8xf32> to vector<1x8x1xf32>
    %107 = vector.broadcast %106 : vector<1x8x1xf32> to vector<1x8x8xf32>
    %108 = arith.subf %104, %107 : vector<1x8x8xf32>
    %109 = math.exp %108 : vector<1x8x8xf32>
    %cst_28 = arith.constant dense<0.000000e+00> : vector<1x8xf32>
    %110 = vector.multi_reduction <add>, %109, %cst_28 [2] : vector<1x8x8xf32> to vector<1x8xf32>
    %111 = vector.shape_cast %110 : vector<1x8xf32> to vector<1x8x1xf32>
    %112 = tpu.reciprocal %111 {approx = true} : vector<1x8x1xf32> -> vector<1x8x1xf32>
    %113 = vector.broadcast %112 : vector<1x8x1xf32> to vector<1x8x8xf32>
    %114 = arith.mulf %109, %113 : vector<1x8x8xf32>
    %115 = arith.truncf %114 : vector<1x8x8xf32> to vector<1x8x8xbf16>
    "tpu.trace_start"() <{level = 10 : i32, message = "bqk,bkd->bqd"}> : () -> ()
    %cst_29 = arith.constant dense<0.000000e+00> : vector<1x8x8xf32>
    %116 = tpu.matmul %115, %103, %cst_29 {dimension_numbers = #tpu.dot_dimension_numbers<[2], [1], [1], [2], [0, 0, 0, 1, 1, 2], [0], [0]>} : vector<1x8x8xbf16>, vector<1x8x8xbf16>, vector<1x8x8xf32> -> vector<1x8x8xf32>
    "tpu.trace_stop"() : () -> ()
    %117 = vector.shape_cast %116 : vector<1x8x8xf32> to vector<8x8xf32>
    %118 = arith.truncf %117 : vector<8x8xf32> to vector<8x8xbf16>
    %119 = tpu.concatenate %55, %76, %97, %118 in 1 : vector<8x8xbf16>, vector<8x8xbf16>, vector<8x8xbf16>, vector<8x8xbf16> -> vector<8x32xbf16>
    %c0_30 = arith.constant 0 : index
    %c0_31 = arith.constant 0 : index
    %120 = vector.load %arg6[%c0_30, %c0_31] : memref<32x32xbf16, #tpu.memory_space<vmem>>, vector<32x32xbf16>
    %cst_32 = arith.constant dense<0.000000e+00> : vector<8x32xf32>
    %121 = tpu.matmul %119, %120, %cst_32 {dimension_numbers = #tpu.dot_dimension_numbers<[1], [0], [0], [1], [0, 0, 1, 1], [], []>} : vector<8x32xbf16>, vector<32x32xbf16>, vector<8x32xf32> -> vector<8x32xf32>
    %122 = arith.addf %0, %121 : vector<8x32xf32>
    %c0_33 = arith.constant 0 : index
    %c0_34 = arith.constant 0 : index
    %123 = vector.load %arg7[%c0_33, %c0_34] : memref<1x32xf32, #tpu.memory_space<vmem>>, vector<1x32xf32>
    %124 = vector.broadcast %123 : vector<1x32xf32> to vector<8x32xf32>
    %125 = arith.addf %122, %124 : vector<8x32xf32>
    %c0_35 = arith.constant 0 : index
    %c0_36 = arith.constant 0 : index
    %126 = vector.load %arg8[%c0_35, %c0_36] : memref<1x32xf32, #tpu.memory_space<vmem>>, vector<1x32xf32>
    %c0_37 = arith.constant 0 : index
    %c0_38 = arith.constant 0 : index
    %127 = vector.load %arg9[%c0_37, %c0_38] : memref<1x32xf32, #tpu.memory_space<vmem>>, vector<1x32xf32>
    %cst_39 = arith.constant dense<0.000000e+00> : vector<8xf32>
    %128 = vector.multi_reduction <add>, %125, %cst_39 [1] : vector<8x32xf32> to vector<8xf32>
    %129 = vector.shape_cast %128 : vector<8xf32> to vector<8x1xf32>
    %cst_40 = arith.constant 3.200000e+01 : f32
    %130 = vector.broadcast %cst_40 : f32 to vector<8x1xf32>
    %131 = arith.divf %129, %130 : vector<8x1xf32>
    %132 = vector.broadcast %131 : vector<8x1xf32> to vector<8x32xf32>
    %133 = arith.subf %125, %132 : vector<8x32xf32>
    %134 = arith.mulf %133, %133 : vector<8x32xf32>
    %cst_41 = arith.constant dense<0.000000e+00> : vector<8xf32>
    %135 = vector.multi_reduction <add>, %134, %cst_41 [1] : vector<8x32xf32> to vector<8xf32>
    %136 = vector.shape_cast %135 : vector<8xf32> to vector<8x1xf32>
    %cst_42 = arith.constant 3.200000e+01 : f32
    %137 = vector.broadcast %cst_42 : f32 to vector<8x1xf32>
    %138 = arith.divf %136, %137 : vector<8x1xf32>
    %cst_43 = arith.constant 9.99999974E-6 : f32
    %139 = vector.broadcast %cst_43 : f32 to vector<8x1xf32>
    %140 = arith.addf %138, %139 : vector<8x1xf32>
    %141 = math.rsqrt %140 : vector<8x1xf32>
    %142 = vector.broadcast %141 : vector<8x1xf32> to vector<8x32xf32>
    %143 = arith.mulf %133, %142 : vector<8x32xf32>
    %144 = vector.broadcast %126 : vector<1x32xf32> to vector<8x32xf32>
    %145 = arith.mulf %143, %144 : vector<8x32xf32>
    %146 = vector.broadcast %127 : vector<1x32xf32> to vector<8x32xf32>
    %147 = arith.addf %145, %146 : vector<8x32xf32>
    %c0_44 = arith.constant 0 : index
    %c0_45 = arith.constant 0 : index
    %148 = vector.load %arg10[%c0_44, %c0_45] : memref<32x128xbf16, #tpu.memory_space<vmem>>, vector<32x128xbf16>
    %c0_46 = arith.constant 0 : index
    %c0_47 = arith.constant 0 : index
    %149 = vector.load %arg11[%c0_46, %c0_47] : memref<1x128xf32, #tpu.memory_space<vmem>>, vector<1x128xf32>
    %c0_48 = arith.constant 0 : index
    %c0_49 = arith.constant 0 : index
    %150 = vector.load %arg12[%c0_48, %c0_49] : memref<128x32xbf16, #tpu.memory_space<vmem>>, vector<128x32xbf16>
    %c0_50 = arith.constant 0 : index
    %c0_51 = arith.constant 0 : index
    %151 = vector.load %arg13[%c0_50, %c0_51] : memref<1x32xf32, #tpu.memory_space<vmem>>, vector<1x32xf32>
    %152 = arith.truncf %147 : vector<8x32xf32> to vector<8x32xbf16>
    %cst_52 = arith.constant dense<0.000000e+00> : vector<8x128xf32>
    %153 = tpu.matmul %152, %148, %cst_52 {dimension_numbers = #tpu.dot_dimension_numbers<[1], [0], [0], [1], [0, 0, 1, 1], [], []>} : vector<8x32xbf16>, vector<32x128xbf16>, vector<8x128xf32> -> vector<8x128xf32>
    %154 = vector.broadcast %149 : vector<1x128xf32> to vector<8x128xf32>
    %155 = arith.addf %153, %154 : vector<8x128xf32>
    %cst_53 = arith.constant 5.000000e-01 : f32
    %156 = vector.broadcast %cst_53 : f32 to vector<8x128xf32>
    %157 = arith.mulf %156, %155 : vector<8x128xf32>
    %cst_54 = arith.constant 4.471500e-02 : f32
    %158 = vector.broadcast %cst_54 : f32 to vector<8x128xf32>
    %159 = arith.mulf %158, %155 : vector<8x128xf32>
    %160 = arith.mulf %159, %155 : vector<8x128xf32>
    %161 = arith.mulf %160, %155 : vector<8x128xf32>
    %162 = arith.addf %155, %161 : vector<8x128xf32>
    %cst_55 = arith.constant 0.797884583 : f32
    %163 = vector.broadcast %cst_55 : f32 to vector<8x128xf32>
    %164 = arith.mulf %163, %162 : vector<8x128xf32>
    %165 = math.tanh %164 : vector<8x128xf32>
    %cst_56 = arith.constant 1.000000e+00 : f32
    %166 = vector.broadcast %cst_56 : f32 to vector<8x128xf32>
    %167 = arith.addf %166, %165 : vector<8x128xf32>
    %168 = arith.mulf %157, %167 : vector<8x128xf32>
    %169 = arith.truncf %168 : vector<8x128xf32> to vector<8x128xbf16>
    %cst_57 = arith.constant dense<0.000000e+00> : vector<8x32xf32>
    %170 = tpu.matmul %169, %150, %cst_57 {dimension_numbers = #tpu.dot_dimension_numbers<[1], [0], [0], [1], [0, 0, 1, 1], [], []>} : vector<8x128xbf16>, vector<128x32xbf16>, vector<8x32xf32> -> vector<8x32xf32>
    %171 = vector.broadcast %151 : vector<1x32xf32> to vector<8x32xf32>
    %172 = arith.addf %170, %171 : vector<8x32xf32>
    %173 = arith.addf %125, %172 : vector<8x32xf32>
    %c0_58 = arith.constant 0 : index
    %c0_59 = arith.constant 0 : index
    %174 = vector.load %arg14[%c0_58, %c0_59] : memref<8x32xf32, #tpu.memory_space<vmem>>, vector<8x32xf32>
    tpu.vector_store %arg14[%c0_58, %c0_59], %173 {strides = array<i32>} : memref<8x32xf32, #tpu.memory_space<vmem>>, vector<8x32xf32>,
    return
  }
  func.func @transform_0(%arg0: i32) -> (i32, i32) {
    %c0_i32 = arith.constant 0 : i32
    %c0_i32_0 = arith.constant 0 : i32
    return %arg0, %c0_i32 : i32, i32
  }
  func.func @transform_1(%arg0: i32) -> (i32, i32) {
    %c0_i32 = arith.constant 0 : i32
    %c0_i32_0 = arith.constant 0 : i32
    %c0_i32_1 = arith.constant 0 : i32
    return %c0_i32, %c0_i32_0 : i32, i32
  }
  func.func @transform_2(%arg0: i32) -> (i32, i32) {
    %c0_i32 = arith.constant 0 : i32
    %c0_i32_0 = arith.constant 0 : i32
    %c0_i32_1 = arith.constant 0 : i32
    return %c0_i32, %c0_i32_0 : i32, i32
  }
  func.func @transform_3(%arg0: i32) -> (i32, i32) {
    %c0_i32 = arith.constant 0 : i32
    %c0_i32_0 = arith.constant 0 : i32
    %c0_i32_1 = arith.constant 0 : i32
    return %c0_i32, %c0_i32_0 : i32, i32
  }
  func.func @transform_4(%arg0: i32) -> (i32, i32) {
    %c0_i32 = arith.constant 0 : i32
    %c0_i32_0 = arith.constant 0 : i32
    %c0_i32_1 = arith.constant 0 : i32
    return %c0_i32, %c0_i32_0 : i32, i32
  }
  func.func @transform_5(%arg0: i32) -> (i32, i32) {
    %c0_i32 = arith.constant 0 : i32
    %c0_i32_0 = arith.constant 0 : i32
    %c0_i32_1 = arith.constant 0 : i32
    return %c0_i32, %c0_i32_0 : i32, i32
  }
  func.func @transform_6(%arg0: i32) -> (i32, i32) {
    %c0_i32 = arith.constant 0 : i32
    %c0_i32_0 = arith.constant 0 : i32
    %c0_i32_1 = arith.constant 0 : i32
    return %c0_i32, %c0_i32_0 : i32, i32
  }
  func.func @transform_7(%arg0: i32) -> (i32, i32) {
    %c0_i32 = arith.constant 0 : i32
    %c0_i32_0 = arith.constant 0 : i32
    %c0_i32_1 = arith.constant 0 : i32
    return %c0_i32, %c0_i32_0 : i32, i32
  }
  func.func @transform_8(%arg0: i32) -> (i32, i32) {
    %c0_i32 = arith.constant 0 : i32
    %c0_i32_0 = arith.constant 0 : i32
    %c0_i32_1 = arith.constant 0 : i32
    return %c0_i32, %c0_i32_0 : i32, i32
  }
  func.func @transform_9(%arg0: i32) -> (i32, i32) {
    %c0_i32 = arith.constant 0 : i32
    %c0_i32_0 = arith.constant 0 : i32
    %c0_i32_1 = arith.constant 0 : i32
    return %c0_i32, %c0_i32_0 : i32, i32
  }
  func.func @transform_10(%arg0: i32) -> (i32, i32) {
    %c0_i32 = arith.constant 0 : i32
    %c0_i32_0 = arith.constant 0 : i32
    %c0_i32_1 = arith.constant 0 : i32
    return %c0_i32, %c0_i32_0 : i32, i32
  }
  func.func @transform_11(%arg0: i32) -> (i32, i32) {
    %c0_i32 = arith.constant 0 : i32
    %c0_i32_0 = arith.constant 0 : i32
    %c0_i32_1 = arith.constant 0 : i32
    return %c0_i32, %c0_i32_0 : i32, i32
  }
  func.func @transform_12(%arg0: i32) -> (i32, i32) {
    %c0_i32 = arith.constant 0 : i32
    %c0_i32_0 = arith.constant 0 : i32
    %c0_i32_1 = arith.constant 0 : i32
    return %c0_i32, %c0_i32_0 : i32, i32
  }
  func.func @transform_13(%arg0: i32) -> (i32, i32) {
    %c0_i32 = arith.constant 0 : i32
    %c0_i32_0 = arith.constant 0 : i32
    return %arg0, %c0_i32 : i32, i32
  }
}

</mosaic_0001>

<llo_original>
// kernel: tpu_custom_call.1
$region0: #{tpu_custom_call.1}
  #allocation0 [shape = 'u32[]', space=smem, size = 0x4, offset = 0x4, fixed_abs, tag = 'smem constant byte address 0x4 - core index']
  #allocation1 [shape = 'u32[144,128]{1,0:T(1,128)}', space=vmem, size = 0x12000, scoped, tag = 'internal scratch']
  %s0 = inlined_call_operand.vmem [shape: f32[16,32], index: 0, kind: input, shape index: {}]
  %s1 = inlined_call_operand.vmem [shape: f32[1,32], index: 1, kind: input, shape index: {}]
  %s2 = inlined_call_operand.vmem [shape: f32[1,32], index: 2, kind: input, shape index: {}]
  %s3 = inlined_call_operand.vmem [shape: bf16[32,96], index: 3, kind: input, shape index: {}]
  %s4 = inlined_call_operand.vmem [shape: f32[1,32], index: 4, kind: input, shape index: {}]
  %s5 = inlined_call_operand.vmem [shape: bf16[32,32], index: 5, kind: input, shape index: {}]
  %s6 = inlined_call_operand.vmem [shape: f32[1,32], index: 6, kind: input, shape index: {}]
  %s7 = inlined_call_operand.vmem [shape: f32[1,32], index: 7, kind: input, shape index: {}]
  %s8 = inlined_call_operand.vmem [shape: f32[1,32], index: 8, kind: input, shape index: {}]
  %s9 = inlined_call_operand.vmem [shape: bf16[32,128], index: 9, kind: input, shape index: {}]
  %s10 = inlined_call_operand.vmem [shape: f32[1,128], index: 10, kind: input, shape index: {}]
  %s11 = inlined_call_operand.vmem [shape: bf16[128,32], index: 11, kind: input, shape index: {}]
  %s12 = inlined_call_operand.vmem [shape: f32[1,32], index: 12, kind: input, shape index: {}]
  %s13 = inlined_call_operand.hbm [shape: f32[16,32], index: 13, kind: output, shape index: {}]
  %s14 = sld [smem:[#allocation0]]
  $region85: #{tpu_custom_call.1} parent=0
    _
  %s16 = ssub.s32 1, %s14
  %s17 = scalar_select 0, %s16, %s14
  $region1: #{tpu_custom_call.1} parent=0
    #allocation2 [shape = 'u8[8192]{0}', space=vmem, size = 0x2000, scoped, tag = 'output window, operand 0']
    #allocation3 [shape = 's32[2]{0}', space=sflag, size = 0x8, scoped, tag = 'scoped memory for tpu_custom_call.1']
    %18 = vsyncpa [#allocation3], 0
    %s19 = scalar_lea.sflag [#allocation3], 1
    %20 = vsyncpa %s19, 0
    loop: start=0, step=1, limit=4
    $region2: #{tpu_custom_call.1} parent=1 // loop_pre_header
      _
    $region3: #{tpu_custom_call.1} parent=1 // loop_header
      %s22 = sphi 0, %s26
      %p23 = scmp.ge.s32.totalorder %s22, 4
      %s32 = sphi 0, %s34
      %s35 = sphi 0, %s32
      %s36 = sphi 0, %s35
      %s52 = sphi 0, %s36
      %s56 = sphi 0, %s56
      %s58 = sphi 0, %s56
      %s59 = sphi 0, %s58
      %s73 = sphi 0, %s59
      %s77 = sphi 0, %s77
      %s79 = sphi 0, %s77
      %s80 = sphi 0, %s79
      %s94 = sphi 0, %s80
      %s98 = sphi 0, %s98
      %s100 = sphi 0, %s98
      %s101 = sphi 0, %s100
      %s115 = sphi 0, %s101
      %s119 = sphi 0, %s119
      %s121 = sphi 0, %s119
      %s122 = sphi 0, %s121
      %s136 = sphi 0, %s122
      %s140 = sphi 0, %s140
      %s142 = sphi 0, %s140
      %s143 = sphi 0, %s142
      %s157 = sphi 0, %s143
      %s161 = sphi 0, %s161
      %s163 = sphi 0, %s161
      %s164 = sphi 0, %s163
      %s178 = sphi 0, %s164
      %s182 = sphi 0, %s182
      %s184 = sphi 0, %s182
      %s185 = sphi 0, %s184
      %s199 = sphi 0, %s185
      %s203 = sphi 0, %s203
      %s205 = sphi 0, %s203
      %s206 = sphi 0, %s205
      %s220 = sphi 0, %s206
      %s224 = sphi 0, %s224
      %s226 = sphi 0, %s224
      %s227 = sphi 0, %s226
      %s241 = sphi 0, %s227
      %s245 = sphi 0, %s245
      %s247 = sphi 0, %s245
      %s248 = sphi 0, %s247
      %s262 = sphi 0, %s248
      %s266 = sphi 0, %s266
      %s268 = sphi 0, %s266
      %s269 = sphi 0, %s268
      %s283 = sphi 0, %s269
      %s287 = sphi 0, %s287
      %s289 = sphi 0, %s287
      %s290 = sphi 0, %s289
      %s304 = sphi 0, %s290
      %s310 = sphi 0, %s312
      %s313 = sphi 0, %s310
      %s314 = sphi 0, %s313
      %s330 = sphi 0, %s314
    $region4: #{tpu_custom_call.1} parent=1 // loop_header_branch
      %25 = sbr.rel (%p23) target = $region8
    $region5: #{tpu_custom_call.1} parent=1 // loop_body
      %s27 = ssub.s32 %s22, 1
      %s28 = ssub.s32 %s22, 2
      %s29 = sadd.s32 %s22, 1
      %s30 = ssub.s32 %s22, %s29
      %p31 = scmp.eq.s32.totalorder %s30, 0
      %s33 = sadd.s32 %s32, 1
      %s34 = scalar_select %p31, %s32, %s33
      %p37 = pneg %p31
      %p38 = scmp.eq.s32.totalorder %s22, 1
      %p39 = por %p37, %p38
      %p40 = scmp.ne.s32.totalorder %s32, %s35
      %p41 = scmp.eq.s32.totalorder %s22, 0
      %p42 = por %p40, %p41
      %p43 = scmp.ne.s32.totalorder %s32, %s35
      %p44 = scmp.eq.s32.totalorder %s27, 1
      %p45 = por %p43, %p44
      %p46 = scmp.ne.s32.totalorder %s35, %s36
      %p47 = scmp.eq.s32.totalorder %s27, 0
      %p48 = por %p46, %p47
      %p49 = scmp.ne.s32.totalorder %s35, %s36
      %p50 = scmp.eq.s32.totalorder %s28, 1
      %p51 = por %p49, %p50
      %p53 = scmp.ne.s32.totalorder %s36, %s52
      %p54 = scmp.eq.s32.totalorder %s28, 0
      %p55 = por %p53, %p54
      %s57 = sadd.s32 %s56, 1
      %p60 = scmp.eq.s32.totalorder %s22, 1
      %p61 = scmp.ne.s32.totalorder %s56, %s58
      %p62 = scmp.eq.s32.totalorder %s22, 0
      %p63 = por %p61, %p62
      %p64 = scmp.ne.s32.totalorder %s56, %s58
      %p65 = scmp.eq.s32.totalorder %s27, 1
      %p66 = por %p64, %p65
      %p67 = scmp.ne.s32.totalorder %s58, %s59
      %p68 = scmp.eq.s32.totalorder %s27, 0
      %p69 = por %p67, %p68
      %p70 = scmp.ne.s32.totalorder %s58, %s59
      %p71 = scmp.eq.s32.totalorder %s28, 1
      %p72 = por %p70, %p71
      %p74 = scmp.ne.s32.totalorder %s59, %s73
      %p75 = scmp.eq.s32.totalorder %s28, 0
      %p76 = por %p74, %p75
      %s78 = sadd.s32 %s77, 1
      %p81 = scmp.eq.s32.totalorder %s22, 1
      %p82 = scmp.ne.s32.totalorder %s77, %s79
      %p83 = scmp.eq.s32.totalorder %s22, 0
      %p84 = por %p82, %p83
      %p85 = scmp.ne.s32.totalorder %s77, %s79
      %p86 = scmp.eq.s32.totalorder %s27, 1
      %p87 = por %p85, %p86
      %p88 = scmp.ne.s32.totalorder %s79, %s80
      %p89 = scmp.eq.s32.totalorder %s27, 0
      %p90 = por %p88, %p89
      %p91 = scmp.ne.s32.totalorder %s79, %s80
      %p92 = scmp.eq.s32.totalorder %s28, 1
      %p93 = por %p91, %p92
      %p95 = scmp.ne.s32.totalorder %s80, %s94
      %p96 = scmp.eq.s32.totalorder %s28, 0
      %p97 = por %p95, %p96
      %s99 = sadd.s32 %s98, 1
      %p102 = scmp.eq.s32.totalorder %s22, 1
      %p103 = scmp.ne.s32.totalorder %s98, %s100
      %p104 = scmp.eq.s32.totalorder %s22, 0
      %p105 = por %p103, %p104
      %p106 = scmp.ne.s32.totalorder %s98, %s100
      %p107 = scmp.eq.s32.totalorder %s27, 1
      %p108 = por %p106, %p107
      %p109 = scmp.ne.s32.totalorder %s100, %s101
      %p110 = scmp.eq.s32.totalorder %s27, 0
      %p111 = por %p109, %p110
      %p112 = scmp.ne.s32.totalorder %s100, %s101
      %p113 = scmp.eq.s32.totalorder %s28, 1
      %p114 = por %p112, %p113
      %p116 = scmp.ne.s32.totalorder %s101, %s115
      %p117 = scmp.eq.s32.totalorder %s28, 0
      %p118 = por %p116, %p117
      %s120 = sadd.s32 %s119, 1
      %p123 = scmp.eq.s32.totalorder %s22, 1
      %p124 = scmp.ne.s32.totalorder %s119, %s121
      %p125 = scmp.eq.s32.totalorder %s22, 0
      %p126 = por %p124, %p125
      %p127 = scmp.ne.s32.totalorder %s119, %s121
      %p128 = scmp.eq.s32.totalorder %s27, 1
      %p129 = por %p127, %p128
      %p130 = scmp.ne.s32.totalorder %s121, %s122
      %p131 = scmp.eq.s32.totalorder %s27, 0
      %p132 = por %p130, %p131
      %p133 = scmp.ne.s32.totalorder %s121, %s122
      %p134 = scmp.eq.s32.totalorder %s28, 1
      %p135 = por %p133, %p134
      %p137 = scmp.ne.s32.totalorder %s122, %s136
      %p138 = scmp.eq.s32.totalorder %s28, 0
      %p139 = por %p137, %p138
      %s141 = sadd.s32 %s140, 1
      %p144 = scmp.eq.s32.totalorder %s22, 1
      %p145 = scmp.ne.s32.totalorder %s140, %s142
      %p146 = scmp.eq.s32.totalorder %s22, 0
      %p147 = por %p145, %p146
      %p148 = scmp.ne.s32.totalorder %s140, %s142
      %p149 = scmp.eq.s32.totalorder %s27, 1
      %p150 = por %p148, %p149
      %p151 = scmp.ne.s32.totalorder %s142, %s143
      %p152 = scmp.eq.s32.totalorder %s27, 0
      %p153 = por %p151, %p152
      %p154 = scmp.ne.s32.totalorder %s142, %s143
      %p155 = scmp.eq.s32.totalorder %s28, 1
      %p156 = por %p154, %p155
      %p158 = scmp.ne.s32.totalorder %s143, %s157
      %p159 = scmp.eq.s32.totalorder %s28, 0
      %p160 = por %p158, %p159
      %s162 = sadd.s32 %s161, 1
      %p165 = scmp.eq.s32.totalorder %s22, 1
      %p166 = scmp.ne.s32.totalorder %s161, %s163
      %p167 = scmp.eq.s32.totalorder %s22, 0
      %p168 = por %p166, %p167
      %p169 = scmp.ne.s32.totalorder %s161, %s163
      %p170 = scmp.eq.s32.totalorder %s27, 1
      %p171 = por %p169, %p170
      %p172 = scmp.ne.s32.totalorder %s163, %s164
      %p173 = scmp.eq.s32.totalorder %s27, 0
      %p174 = por %p172, %p173
      %p175 = scmp.ne.s32.totalorder %s163, %s164
      %p176 = scmp.eq.s32.totalorder %s28, 1
      %p177 = por %p175, %p176
      %p179 = scmp.ne.s32.totalorder %s164, %s178
      %p180 = scmp.eq.s32.totalorder %s28, 0
      %p181 = por %p179, %p180
      %s183 = sadd.s32 %s182, 1
      %p186 = scmp.eq.s32.totalorder %s22, 1
      %p187 = scmp.ne.s32.totalorder %s182, %s184
      %p188 = scmp.eq.s32.totalorder %s22, 0
      %p189 = por %p187, %p188
      %p190 = scmp.ne.s32.totalorder %s182, %s184
      %p191 = scmp.eq.s32.totalorder %s27, 1
      %p192 = por %p190, %p191
      %p193 = scmp.ne.s32.totalorder %s184, %s185
      %p194 = scmp.eq.s32.totalorder %s27, 0
      %p195 = por %p193, %p194
      %p196 = scmp.ne.s32.totalorder %s184, %s185
      %p197 = scmp.eq.s32.totalorder %s28, 1
      %p198 = por %p196, %p197
      %p200 = scmp.ne.s32.totalorder %s185, %s199
      %p201 = scmp.eq.s32.totalorder %s28, 0
      %p202 = por %p200, %p201
      %s204 = sadd.s32 %s203, 1
      %p207 = scmp.eq.s32.totalorder %s22, 1
      %p208 = scmp.ne.s32.totalorder %s203, %s205
      %p209 = scmp.eq.s32.totalorder %s22, 0
      %p210 = por %p208, %p209
      %p211 = scmp.ne.s32.totalorder %s203, %s205
      %p212 = scmp.eq.s32.totalorder %s27, 1
      %p213 = por %p211, %p212
      %p214 = scmp.ne.s32.totalorder %s205, %s206
      %p215 = scmp.eq.s32.totalorder %s27, 0
      %p216 = por %p214, %p215
      %p217 = scmp.ne.s32.totalorder %s205, %s206
      %p218 = scmp.eq.s32.totalorder %s28, 1
      %p219 = por %p217, %p218
      %p221 = scmp.ne.s32.totalorder %s206, %s220
      %p222 = scmp.eq.s32.totalorder %s28, 0
      %p223 = por %p221, %p222
      %s225 = sadd.s32 %s224, 1
      %p228 = scmp.eq.s32.totalorder %s22, 1
      %p229 = scmp.ne.s32.totalorder %s224, %s226
      %p230 = scmp.eq.s32.totalorder %s22, 0
      %p231 = por %p229, %p230
      %p232 = scmp.ne.s32.totalorder %s224, %s226
      %p233 = scmp.eq.s32.totalorder %s27, 1
      %p234 = por %p232, %p233
      %p235 = scmp.ne.s32.totalorder %s226, %s227
      %p236 = scmp.eq.s32.totalorder %s27, 0
      %p237 = por %p235, %p236
      %p238 = scmp.ne.s32.totalorder %s226, %s227
      %p239 = scmp.eq.s32.totalorder %s28, 1
      %p240 = por %p238, %p239
      %p242 = scmp.ne.s32.totalorder %s227, %s241
      %p243 = scmp.eq.s32.totalorder %s28, 0
      %p244 = por %p242, %p243
      %s246 = sadd.s32 %s245, 1
      %p249 = scmp.eq.s32.totalorder %s22, 1
      %p250 = scmp.ne.s32.totalorder %s245, %s247
      %p251 = scmp.eq.s32.totalorder %s22, 0
      %p252 = por %p250, %p251
      %p253 = scmp.ne.s32.totalorder %s245, %s247
      %p254 = scmp.eq.s32.totalorder %s27, 1
      %p255 = por %p253, %p254
      %p256 = scmp.ne.s32.totalorder %s247, %s248
      %p257 = scmp.eq.s32.totalorder %s27, 0
      %p258 = por %p256, %p257
      %p259 = scmp.ne.s32.totalorder %s247, %s248
      %p260 = scmp.eq.s32.totalorder %s28, 1
      %p261 = por %p259, %p260
      %p263 = scmp.ne.s32.totalorder %s248, %s262
      %p264 = scmp.eq.s32.totalorder %s28, 0
      %p265 = por %p263, %p264
      %s267 = sadd.s32 %s266, 1
      %p270 = scmp.eq.s32.totalorder %s22, 1
      %p271 = scmp.ne.s32.totalorder %s266, %s268
      %p272 = scmp.eq.s32.totalorder %s22, 0
      %p273 = por %p271, %p272
      %p274 = scmp.ne.s32.totalorder %s266, %s268
      %p275 = scmp.eq.s32.totalorder %s27, 1
      %p276 = por %p274, %p275
      %p277 = scmp.ne.s32.totalorder %s268, %s269
      %p278 = scmp.eq.s32.totalorder %s27, 0
      %p279 = por %p277, %p278
      %p280 = scmp.ne.s32.totalorder %s268, %s269
      %p281 = scmp.eq.s32.totalorder %s28, 1
      %p282 = por %p280, %p281
      %p284 = scmp.ne.s32.totalorder %s269, %s283
      %p285 = scmp.eq.s32.totalorder %s28, 0
      %p286 = por %p284, %p285
      %s288 = sadd.s32 %s287, 1
      %p291 = scmp.eq.s32.totalorder %s22, 1
      %p292 = scmp.ne.s32.totalorder %s287, %s289
      %p293 = scmp.eq.s32.totalorder %s22, 0
      %p294 = por %p292, %p293
      %p295 = scmp.ne.s32.totalorder %s287, %s289
      %p296 = scmp.eq.s32.totalorder %s27, 1
      %p297 = por %p295, %p296
      %p298 = scmp.ne.s32.totalorder %s289, %s290
      %p299 = scmp.eq.s32.totalorder %s27, 0
      %p300 = por %p298, %p299
      %p301 = scmp.ne.s32.totalorder %s289, %s290
      %p302 = scmp.eq.s32.totalorder %s28, 1
      %p303 = por %p301, %p302
      %p305 = scmp.ne.s32.totalorder %s290, %s304
      %p306 = scmp.eq.s32.totalorder %s28, 0
      %p307 = por %p305, %p306
      %s308 = ssub.s32 %s22, %s29
      %p309 = scmp.eq.s32.totalorder %s308, 0
      %s311 = sadd.s32 %s310, 1
      %s312 = scalar_select %p309, %s310, %s311
      %p315 = pneg %p309
      %p316 = scmp.eq.s32.totalorder %s22, 1
      %p317 = por %p315, %p316
      %p318 = scmp.ne.s32.totalorder %s310, %s313
      %p319 = scmp.eq.s32.totalorder %s22, 0
      %p320 = por %p318, %p319
      %p321 = scmp.ne.s32.totalorder %s310, %s313
      %p322 = scmp.eq.s32.totalorder %s27, 1
      %p323 = por %p321, %p322
      %p324 = scmp.ne.s32.totalorder %s313, %s314
      %p325 = scmp.eq.s32.totalorder %s27, 0
      %p326 = por %p324, %p325
      %p327 = scmp.ne.s32.totalorder %s313, %s314
      %p328 = scmp.eq.s32.totalorder %s28, 1
      %p329 = por %p327, %p328
      %p331 = scmp.ne.s32.totalorder %s314, %s330
      %p332 = scmp.eq.s32.totalorder %s28, 0
      %p333 = por %p331, %p332
      %p334 = scmp.le.s32.totalorder 1, %s22
      %p335 = scmp.lt.s32.totalorder %s22, 3
      %p336 = pnand %p334, %p335
      %p337 = pneg %p336
      // Predicated region
      $region9: #{tpu_custom_call.1} parent=5 // pred_check
        _
      $region10: #{tpu_custom_call.1} parent=5 // pred_check_branch
        %339 = sbr.rel (%p336) target = $region12
      $region11: #{tpu_custom_call.1} parent=5 // pred_region
        %s340 = ssub.s32 %s22, 1
        // Predicated region
        $region13: #{tpu_custom_call.1} parent=11 // pred_check
          %p341 = pneg %p69
        $region14: #{tpu_custom_call.1} parent=11 // pred_check_branch
          %343 = sbr.rel (%p341) target = $region16
        $region15: #{tpu_custom_call.1} parent=11 // pred_region
          _
        $region16: #{tpu_custom_call.1} parent=11 // pred_fallthru
          _
        // Predicated region
        $region17: #{tpu_custom_call.1} parent=11 // pred_check
          %p344 = pneg %p90
        $region18: #{tpu_custom_call.1} parent=11 // pred_check_branch
          %346 = sbr.rel (%p344) target = $region20
        $region19: #{tpu_custom_call.1} parent=11 // pred_region
          _
        $region20: #{tpu_custom_call.1} parent=11 // pred_fallthru
          _
        // Predicated region
        $region21: #{tpu_custom_call.1} parent=11 // pred_check
          %p347 = pneg %p111
        $region22: #{tpu_custom_call.1} parent=11 // pred_check_branch
          %349 = sbr.rel (%p347) target = $region24
        $region23: #{tpu_custom_call.1} parent=11 // pred_region
          _
        $region24: #{tpu_custom_call.1} parent=11 // pred_fallthru
          _
        // Predicated region
        $region25: #{tpu_custom_call.1} parent=11 // pred_check
          %p350 = pneg %p132
        $region26: #{tpu_custom_call.1} parent=11 // pred_check_branch
          %352 = sbr.rel (%p350) target = $region28
        $region27: #{tpu_custom_call.1} parent=11 // pred_region
          _
        $region28: #{tpu_custom_call.1} parent=11 // pred_fallthru
          _
        // Predicated region
        $region29: #{tpu_custom_call.1} parent=11 // pred_check
          %p353 = pneg %p153
        $region30: #{tpu_custom_call.1} parent=11 // pred_check_branch
          %355 = sbr.rel (%p353) target = $region32
        $region31: #{tpu_custom_call.1} parent=11 // pred_region
          _
        $region32: #{tpu_custom_call.1} parent=11 // pred_fallthru
          _
        // Predicated region
        $region33: #{tpu_custom_call.1} parent=11 // pred_check
          %p356 = pneg %p174
        $region34: #{tpu_custom_call.1} parent=11 // pred_check_branch
          %358 = sbr.rel (%p356) target = $region36
        $region35: #{tpu_custom_call.1} parent=11 // pred_region
          _
        $region36: #{tpu_custom_call.1} parent=11 // pred_fallthru
          _
        // Predicated region
        $region37: #{tpu_custom_call.1} parent=11 // pred_check
          %p359 = pneg %p195
        $region38: #{tpu_custom_call.1} parent=11 // pred_check_branch
          %361 = sbr.rel (%p359) target = $region40
        $region39: #{tpu_custom_call.1} parent=11 // pred_region
          _
        $region40: #{tpu_custom_call.1} parent=11 // pred_fallthru
          _
        // Predicated region
        $region41: #{tpu_custom_call.1} parent=11 // pred_check
          %p362 = pneg %p216
        $region42: #{tpu_custom_call.1} parent=11 // pred_check_branch
          %364 = sbr.rel (%p362) target = $region44
        $region43: #{tpu_custom_call.1} parent=11 // pred_region
          _
        $region44: #{tpu_custom_call.1} parent=11 // pred_fallthru
          _
        // Predicated region
        $region45: #{tpu_custom_call.1} parent=11 // pred_check
          %p365 = pneg %p237
        $region46: #{tpu_custom_call.1} parent=11 // pred_check_branch
          %367 = sbr.rel (%p365) target = $region48
        $region47: #{tpu_custom_call.1} parent=11 // pred_region
          _
        $region48: #{tpu_custom_call.1} parent=11 // pred_fallthru
          _
        // Predicated region
        $region49: #{tpu_custom_call.1} parent=11 // pred_check
          %p368 = pneg %p258
        $region50: #{tpu_custom_call.1} parent=11 // pred_check_branch
          %370 = sbr.rel (%p368) target = $region52
        $region51: #{tpu_custom_call.1} parent=11 // pred_region
          _
        $region52: #{tpu_custom_call.1} parent=11 // pred_fallthru
          _
        // Predicated region
        $region53: #{tpu_custom_call.1} parent=11 // pred_check
          %p371 = pneg %p279
        $region54: #{tpu_custom_call.1} parent=11 // pred_check_branch
          %373 = sbr.rel (%p371) target = $region56
        $region55: #{tpu_custom_call.1} parent=11 // pred_region
          _
        $region56: #{tpu_custom_call.1} parent=11 // pred_fallthru
          _
        // Predicated region
        $region57: #{tpu_custom_call.1} parent=11 // pred_check
          %p374 = pneg %p300
        $region58: #{tpu_custom_call.1} parent=11 // pred_check_branch
          %376 = sbr.rel (%p374) target = $region60
        $region59: #{tpu_custom_call.1} parent=11 // pred_region
          _
        $region60: #{tpu_custom_call.1} parent=11 // pred_fallthru
          _
      $region12: #{tpu_custom_call.1} parent=5 // pred_fallthru
        _
      %p377 = scmp.lt.s32.totalorder %s22, 2
      // Predicated region
      $region61: #{tpu_custom_call.1} parent=5 // pred_check
        %p378 = pneg %p377
      $region62: #{tpu_custom_call.1} parent=5 // pred_check_branch
        %380 = sbr.rel (%p378) target = $region64
      $region63: #{tpu_custom_call.1} parent=5 // pred_region
        // Predicated region
        $region65: #{tpu_custom_call.1} parent=63 // pred_check
          %p381 = pneg %p42
        $region66: #{tpu_custom_call.1} parent=63 // pred_check_branch
          %383 = sbr.rel (%p381) target = $region68
        $region67: #{tpu_custom_call.1} parent=63 // pred_region
          %p384 = scmp.lt.s32.totalorder %s22, 1
          %s385 = scalar_select %p384, %s22, 1
          %s386 = smul.addr %s385, 8
          %s387 = scalar_lea.vmem %s0, %s386
        $region68: #{tpu_custom_call.1} parent=63 // pred_fallthru
          _
      $region64: #{tpu_custom_call.1} parent=5 // pred_fallthru
        _
      %p388 = scmp.le.s32.totalorder 1, %s22
      %p389 = scmp.lt.s32.totalorder %s22, 3
      %p390 = pnand %p388, %p389
      %p391 = pneg %p390
      // Predicated region
      $region69: #{tpu_custom_call.1} parent=5 // pred_check
        _
      $region70: #{tpu_custom_call.1} parent=5 // pred_check_branch
        %393 = sbr.rel (%p390) target = $region72
      $region71: #{tpu_custom_call.1} parent=5 // pred_region
        %s394 = ssub.s32 %s22, 1
        %p395 = scmp.lt.s32.totalorder %s27, 1
        %s396 = scalar_select %p395, %s27, 1
        %s397 = smul.addr %s396, 8
        %s398 = scalar_lea.vmem %s0, %s397
        %p399 = pneg %p48
        %p400 = pneg %p45
        %p401 = pneg %p69
        %p402 = pneg %p66
        %p403 = pneg %p90
        %p404 = pneg %p87
        %p405 = pneg %p111
        %p406 = pneg %p108
        %p407 = pneg %p132
        %p408 = pneg %p129
        %p409 = pneg %p153
        %p410 = pneg %p150
        %p411 = pneg %p174
        %p412 = pneg %p171
        %p413 = pneg %p195
        %p414 = pneg %p192
        %p415 = pneg %p216
        %p416 = pneg %p213
        %p417 = pneg %p237
        %p418 = pneg %p234
        %p419 = pneg %p258
        %p420 = pneg %p255
        %p421 = pneg %p279
        %p422 = pneg %p276
        %p423 = pneg %p300
        %p424 = pneg %p297
        %p425 = pneg %p326
        %p426 = pneg %p323
        %s427 = sand.u32 %s313, 1
        %s428 = scalar_lea.sflag [#allocation3], %s427
        %s429 = sand.u32 %s313, 1
        %s430 = smul.addr %s429, 8
        %s431 = scalar_lea.vmem [#allocation2], %s430
        %p432 = scmp.lt.s32.totalorder %s27, 1
        %s433 = scalar_select %p432, %s27, 1
        %s434 = smul.addr %s433, 8
        %s435 = scalar_lea.vmem %s0, %s434
        %v437 = vld [vmem:[%s435] sm:$0xff]
        %v438 = vld [vmem:[%s1] sm:$0x1]
        %v439 = vld [vmem:[%s2] sm:$0x1]
        %vm440 = vcmask 261120
        %v441 = vsel %vm440, %v437, 0.0
        %442 = vadd.xlane.f32.xlu0 %v441
        %v443 = vpop.xlane.xlu0 %442
        %v444 = vrcp.pop 32.0
        %v445 = vmul.f32 %v443, %v444
        %v446 = vsub.f32 %v437, %v445
        %v447 = vmul.f32 %v446, %v446
        %v448 = vsel %vm440, %v447, 0.0
        %449 = vadd.xlane.f32.xlu0 %v448
        %v450 = vpop.xlane.xlu0 %449
        %v451 = vmul.f32 %v450, %v444
        %v452 = vadd.f32 %v451, 1e-05
        %v453 = vrsqrt.pop %v452
        %v454 = vmul.f32 %v446, %v453
        %v456 = vlaneseq
        %v457 = vshrl.u32 %v456, 7
        %v458 = vsub.s32 0, %v457
        %v459 = vrot.slane %v438, %v458
        %v461 = vmul.f32 %v454, %v459
        %v463 = vlaneseq
        %v464 = vshrl.u32 %v463, 7
        %v465 = vsub.s32 0, %v464
        %v466 = vrot.slane %v439, %v465
        %v468 = vadd.f32 %v461, %v466
        %v469 = vpack.c.bf16 %v468, %v468
        %v470 = vld [vmem:[%s3] sm:$0xf]
        %v471 = vld [vmem:[%s3 + $0x4] sm:$0xf]
        %v472 = vld [vmem:[%s3 + $0x8] sm:$0xf]
        %v473 = vld [vmem:[%s3 + $0xc] sm:$0xf]
        %v478 = vunpack.c.l.b16 %v470
        %v479 = vunpack.c.l.b16 %v471
        %v480 = vunpack.c.l.b16 %v472
        %v481 = vunpack.c.l.b16 %v473
        %v482 = vpack.c.b16 %v479, %v478
        %v483 = vpack.c.b16 %v481, %v480
        %v487 = vsel %vm440, %v469, 0
        %489 = vmatprep.subr.bf16.mxu0 0
        %490 = vmatpush1.bf16.msra.mxu0 %v482
        %491 = vmatprep.subr.bf16.mxu0 0
        %492 = vmatpush1.bf16.msra.mxu0 %v483
        %493 = vmatprep.subr.bf16.mxu0 0
        %494 = vmatpush1.bf16.msra.mxu0 0
        %495 = vmatprep.subr.bf16.mxu0 0
        %496 = vmatpush1.bf16.msra.mxu0 0
        %497 = vmatprep.subr.bf16.mxu0 0
        %498 = vmatpush1.bf16.msra.mxu0 0
        %499 = vmatprep.subr.bf16.mxu0 0
        %500 = vmatpush1.bf16.msra.mxu0 0
        %501 = vmatprep.subr.bf16.mxu0 0
        %502 = vmatpush1.bf16.msra.mxu0 0
        %503 = vmatprep.subr.bf16.mxu0 0
        %504 = vmatpush1.bf16.msra.mxu0 0
        %505 = vmatprep.subr.bf16.mxu0 0
        %506 = vmatpush1.bf16.msra.mxu0 0
        %507 = vmatprep.subr.bf16.mxu0 0
        %508 = vmatpush1.bf16.msra.mxu0 0
        %509 = vmatprep.subr.bf16.mxu0 0
        %510 = vmatpush1.bf16.msra.mxu0 0
        %511 = vmatprep.subr.bf16.mxu0 0
        %512 = vmatpush1.bf16.msra.mxu0 0
        %513 = vmatprep.subr.bf16.mxu0 0
        %514 = vmatpush1.bf16.msra.mxu0 0
        %515 = vmatprep.subr.bf16.mxu0 0
        %516 = vmatpush1.bf16.msra.mxu0 0
        %517 = vmatprep.subr.bf16.mxu0 0
        %518 = vmatpush1.bf16.msra.mxu0 0
        %519 = vmatprep.subr.bf16.mxu0 0
        %520 = vmatpush1.bf16.msra.mxu0 0
        %521 = vmatprep.mubr.bf16.mxu0 0
        %522 = vmatmul.mubr.bf16.gmra.mrb[0].mxu0 %v487
        %v523 = vpop.f32.mrb[0].mxu0
        %v524 = vadd.f32 0.0, %v523
        %v525 = vpop.f32.mrb[0].mxu0
        %v526 = vpop.f32.mrb[0].mxu0
        %v527 = vpop.f32.mrb[0].mxu0
        %528 = vdwg.mxu0
        %v529 = vld [vmem:[%s4] sm:$0x1]
        %v531 = vlaneseq
        %v532 = vshrl.u32 %v531, 7
        %v533 = vsub.s32 0, %v532
        %v534 = vrot.slane %v529, %v533
        %v536 = vadd.f32 %v524, %v534
        %v537 = vpack.c.bf16 %v536, %v536
        %v538 = vpack.c.bf16 %v524, %v524
        %540 = vrot.lane.b32.xlu0 %v538, 96
        %v541 = vpop.permute.xlu0 %540
        %vm542 = vcmask 64512
        %v544 = vsel %vm542, %v537, 0
        %v547 = vsel %vm542, %v541, 0
        %549 = vmatprep.subr.bf16.mxu0 0
        %550 = vmatpush1.bf16.xpose.msra.mxu0 %v547
        %551 = vmatprep.subr.bf16.mxu0 0
        %552 = vmatpush1.bf16.xpose.msra.mxu0 0
        %553 = vmatprep.subr.bf16.mxu0 0
        %554 = vmatpush1.bf16.xpose.msra.mxu0 0
        %555 = vmatprep.subr.bf16.mxu0 0
        %556 = vmatpush1.bf16.xpose.msra.mxu0 0
        %557 = vmatprep.subr.bf16.mxu0 0
        %558 = vmatpush1.bf16.xpose.msra.mxu0 0
        %559 = vmatprep.subr.bf16.mxu0 0
        %560 = vmatpush1.bf16.xpose.msra.mxu0 0
        %561 = vmatprep.subr.bf16.mxu0 0
        %562 = vmatpush1.bf16.xpose.msra.mxu0 0
        %563 = vmatprep.subr.bf16.mxu0 0
        %564 = vmatpush1.bf16.xpose.msra.mxu0 0
        %565 = vmatprep.subr.bf16.mxu0 0
        %566 = vmatpush1.bf16.xpose.msra.mxu0 0
        %567 = vmatprep.subr.bf16.mxu0 0
        %568 = vmatpush1.bf16.xpose.msra.mxu0 0
        %569 = vmatprep.subr.bf16.mxu0 0
        %570 = vmatpush1.bf16.xpose.msra.mxu0 0
        %571 = vmatprep.subr.bf16.mxu0 0
        %572 = vmatpush1.bf16.xpose.msra.mxu0 0
        %573 = vmatprep.subr.bf16.mxu0 0
        %574 = vmatpush1.bf16.xpose.msra.mxu0 0
        %575 = vmatprep.subr.bf16.mxu0 0
        %576 = vmatpush1.bf16.xpose.msra.mxu0 0
        %577 = vmatprep.subr.bf16.mxu0 0
        %578 = vmatpush1.bf16.xpose.msra.mxu0 0
        %579 = vmatprep.subr.bf16.mxu0 0
        %580 = vmatpush1.bf16.xpose.msra.mxu0 0
        %581 = vmatprep.mubr.bf16.mxu0 0
        %582 = vmatmul.mubr.bf16.gmra.mrb[0].mxu0 %v544
        %v583 = vpop.f32.mrb[0].mxu0
        %v584 = vadd.f32 0.0, %v583
        %v585 = vpop.f32.mrb[0].mxu0
        %v586 = vpop.f32.mrb[0].mxu0
        %v587 = vpop.f32.mrb[0].mxu0
        %588 = vdwg.mxu0
        %v589 = vsel %vm542, %v584, -inf
        %590 = vmax.xlane.f32.xlu0 %v589
        %v591 = vpop.xlane.xlu0 %590
        %v592 = vsub.f32 %v584, %v591
        %v593 = vmul.f32 %v592, 1.442695
        %v594 = vpow.pop %v593
        %v595 = vsel %vm542, %v594, 0.0
        %596 = vadd.xlane.f32.xlu0 %v595
        %v597 = vpop.xlane.xlu0 %596
        %v598 = vrcp.pop %v597
        %v599 = vmul.f32 %v594, %v598
        %v600 = vpack.c.bf16 %v599, %v599
        %601 = vrot.lane.b32.xlu0 %v538, 64
        %v602 = vpop.permute.xlu0 %601
        %v604 = vsel %vm542, %v600, 0
        %vm606 = vcmask 1043456
        %v608 = vsel %vm606, %v602, 0
        %610 = vmatprep.subr.bf16.mxu0 0
        %611 = vmatpush1.bf16.msra.mxu0 %v608
        %612 = vmatprep.subr.bf16.mxu0 0
        %613 = vmatpush1.bf16.msra.mxu0 0
        %614 = vmatprep.subr.bf16.mxu0 0
        %615 = vmatpush1.bf16.msra.mxu0 0
        %616 = vmatprep.subr.bf16.mxu0 0
        %617 = vmatpush1.bf16.msra.mxu0 0
        %618 = vmatprep.subr.bf16.mxu0 0
        %619 = vmatpush1.bf16.msra.mxu0 0
        %620 = vmatprep.subr.bf16.mxu0 0
        %621 = vmatpush1.bf16.msra.mxu0 0
        %622 = vmatprep.subr.bf16.mxu0 0
        %623 = vmatpush1.bf16.msra.mxu0 0
        %624 = vmatprep.subr.bf16.mxu0 0
        %625 = vmatpush1.bf16.msra.mxu0 0
        %626 = vmatprep.subr.bf16.mxu0 0
        %627 = vmatpush1.bf16.msra.mxu0 0
        %628 = vmatprep.subr.bf16.mxu0 0
        %629 = vmatpush1.bf16.msra.mxu0 0
        %630 = vmatprep.subr.bf16.mxu0 0
        %631 = vmatpush1.bf16.msra.mxu0 0
        %632 = vmatprep.subr.bf16.mxu0 0
        %633 = vmatpush1.bf16.msra.mxu0 0
        %634 = vmatprep.subr.bf16.mxu0 0
        %635 = vmatpush1.bf16.msra.mxu0 0
        %636 = vmatprep.subr.bf16.mxu0 0
        %637 = vmatpush1.bf16.msra.mxu0 0
        %638 = vmatprep.subr.bf16.mxu0 0
        %639 = vmatpush1.bf16.msra.mxu0 0
        %640 = vmatprep.subr.bf16.mxu0 0
        %641 = vmatpush1.bf16.msra.mxu0 0
        %642 = vmatprep.mubr.bf16.mxu0 0
        %643 = vmatmul.mubr.bf16.gmra.mrb[0].mxu0 %v604
        %v644 = vpop.f32.mrb[0].mxu0
        %v645 = vadd.f32 0.0, %v644
        %v646 = vpop.f32.mrb[0].mxu0
        %v647 = vpop.f32.mrb[0].mxu0
        %v648 = vpop.f32.mrb[0].mxu0
        %649 = vdwg.mxu0
        %v650 = vpack.c.bf16 %v645, %v645
        %652 = vrot.lane.b32.xlu0 %v537, 120
        %v653 = vpop.permute.xlu0 %652
        %654 = vrot.lane.b32.xlu0 %v538, 88
        %v655 = vpop.permute.xlu0 %654
        %v657 = vsel %vm542, %v653, 0
        %v660 = vsel %vm542, %v655, 0
        %662 = vmatprep.subr.bf16.mxu0 0
        %663 = vmatpush1.bf16.xpose.msra.mxu0 %v660
        %664 = vmatprep.subr.bf16.mxu0 0
        %665 = vmatpush1.bf16.xpose.msra.mxu0 0
        %666 = vmatprep.subr.bf16.mxu0 0
        %667 = vmatpush1.bf16.xpose.msra.mxu0 0
        %668 = vmatprep.subr.bf16.mxu0 0
        %669 = vmatpush1.bf16.xpose.msra.mxu0 0
        %670 = vmatprep.subr.bf16.mxu0 0
        %671 = vmatpush1.bf16.xpose.msra.mxu0 0
        %672 = vmatprep.subr.bf16.mxu0 0
        %673 = vmatpush1.bf16.xpose.msra.mxu0 0
        %674 = vmatprep.subr.bf16.mxu0 0
        %675 = vmatpush1.bf16.xpose.msra.mxu0 0
        %676 = vmatprep.subr.bf16.mxu0 0
        %677 = vmatpush1.bf16.xpose.msra.mxu0 0
        %678 = vmatprep.subr.bf16.mxu0 0
        %679 = vmatpush1.bf16.xpose.msra.mxu0 0
        %680 = vmatprep.subr.bf16.mxu0 0
        %681 = vmatpush1.bf16.xpose.msra.mxu0 0
        %682 = vmatprep.subr.bf16.mxu0 0
        %683 = vmatpush1.bf16.xpose.msra.mxu0 0
        %684 = vmatprep.subr.bf16.mxu0 0
        %685 = vmatpush1.bf16.xpose.msra.mxu0 0
        %686 = vmatprep.subr.bf16.mxu0 0
        %687 = vmatpush1.bf16.xpose.msra.mxu0 0
        %688 = vmatprep.subr.bf16.mxu0 0
        %689 = vmatpush1.bf16.xpose.msra.mxu0 0
        %690 = vmatprep.subr.bf16.mxu0 0
        %691 = vmatpush1.bf16.xpose.msra.mxu0 0
        %692 = vmatprep.subr.bf16.mxu0 0
        %693 = vmatpush1.bf16.xpose.msra.mxu0 0
        %694 = vmatprep.mubr.bf16.mxu0 0
        %695 = vmatmul.mubr.bf16.gmra.mrb[0].mxu0 %v657
        %v696 = vpop.f32.mrb[0].mxu0
        %v697 = vadd.f32 0.0, %v696
        %v698 = vpop.f32.mrb[0].mxu0
        %v699 = vpop.f32.mrb[0].mxu0
        %v700 = vpop.f32.mrb[0].mxu0
        %701 = vdwg.mxu0
        %v702 = vsel %vm542, %v697, -inf
        %703 = vmax.xlane.f32.xlu0 %v702
        %v704 = vpop.xlane.xlu0 %703
        %v705 = vsub.f32 %v697, %v704
        %v706 = vmul.f32 %v705, 1.442695
        %v707 = vpow.pop %v706
        %v708 = vsel %vm542, %v707, 0.0
        %709 = vadd.xlane.f32.xlu0 %v708
        %v710 = vpop.xlane.xlu0 %709
        %v711 = vrcp.pop %v710
        %v712 = vmul.f32 %v707, %v711
        %v713 = vpack.c.bf16 %v712, %v712
        %714 = vrot.lane.b32.xlu0 %v538, 56
        %v715 = vpop.permute.xlu0 %714
        %v717 = vsel %vm542, %v713, 0
        %v720 = vsel %vm606, %v715, 0
        %722 = vmatprep.subr.bf16.mxu0 0
        %723 = vmatpush1.bf16.msra.mxu0 %v720
        %724 = vmatprep.subr.bf16.mxu0 0
        %725 = vmatpush1.bf16.msra.mxu0 0
        %726 = vmatprep.subr.bf16.mxu0 0
        %727 = vmatpush1.bf16.msra.mxu0 0
        %728 = vmatprep.subr.bf16.mxu0 0
        %729 = vmatpush1.bf16.msra.mxu0 0
        %730 = vmatprep.subr.bf16.mxu0 0
        %731 = vmatpush1.bf16.msra.mxu0 0
        %732 = vmatprep.subr.bf16.mxu0 0
        %733 = vmatpush1.bf16.msra.mxu0 0
        %734 = vmatprep.subr.bf16.mxu0 0
        %735 = vmatpush1.bf16.msra.mxu0 0
        %736 = vmatprep.subr.bf16.mxu0 0
        %737 = vmatpush1.bf16.msra.mxu0 0
        %738 = vmatprep.subr.bf16.mxu0 0
        %739 = vmatpush1.bf16.msra.mxu0 0
        %740 = vmatprep.subr.bf16.mxu0 0
        %741 = vmatpush1.bf16.msra.mxu0 0
        %742 = vmatprep.subr.bf16.mxu0 0
        %743 = vmatpush1.bf16.msra.mxu0 0
        %744 = vmatprep.subr.bf16.mxu0 0
        %745 = vmatpush1.bf16.msra.mxu0 0
        %746 = vmatprep.subr.bf16.mxu0 0
        %747 = vmatpush1.bf16.msra.mxu0 0
        %748 = vmatprep.subr.bf16.mxu0 0
        %749 = vmatpush1.bf16.msra.mxu0 0
        %750 = vmatprep.subr.bf16.mxu0 0
        %751 = vmatpush1.bf16.msra.mxu0 0
        %752 = vmatprep.subr.bf16.mxu0 0
        %753 = vmatpush1.bf16.msra.mxu0 0
        %754 = vmatprep.mubr.bf16.mxu0 0
        %755 = vmatmul.mubr.bf16.gmra.mrb[0].mxu0 %v717
        %v756 = vpop.f32.mrb[0].mxu0
        %v757 = vadd.f32 0.0, %v756
        %v758 = vpop.f32.mrb[0].mxu0
        %v759 = vpop.f32.mrb[0].mxu0
        %v760 = vpop.f32.mrb[0].mxu0
        %761 = vdwg.mxu0
        %v762 = vpack.c.bf16 %v757, %v757
        %763 = vrot.lane.b32.xlu0 %v537, 112
        %v764 = vpop.permute.xlu0 %763
        %765 = vrot.lane.b32.xlu0 %v538, 80
        %v766 = vpop.permute.xlu0 %765
        %v768 = vsel %vm542, %v764, 0
        %v771 = vsel %vm542, %v766, 0
        %773 = vmatprep.subr.bf16.mxu0 0
        %774 = vmatpush1.bf16.xpose.msra.mxu0 %v771
        %775 = vmatprep.subr.bf16.mxu0 0
        %776 = vmatpush1.bf16.xpose.msra.mxu0 0
        %777 = vmatprep.subr.bf16.mxu0 0
        %778 = vmatpush1.bf16.xpose.msra.mxu0 0
        %779 = vmatprep.subr.bf16.mxu0 0
        %780 = vmatpush1.bf16.xpose.msra.mxu0 0
        %781 = vmatprep.subr.bf16.mxu0 0
        %782 = vmatpush1.bf16.xpose.msra.mxu0 0
        %783 = vmatprep.subr.bf16.mxu0 0
        %784 = vmatpush1.bf16.xpose.msra.mxu0 0
        %785 = vmatprep.subr.bf16.mxu0 0
        %786 = vmatpush1.bf16.xpose.msra.mxu0 0
        %787 = vmatprep.subr.bf16.mxu0 0
        %788 = vmatpush1.bf16.xpose.msra.mxu0 0
        %789 = vmatprep.subr.bf16.mxu0 0
        %790 = vmatpush1.bf16.xpose.msra.mxu0 0
        %791 = vmatprep.subr.bf16.mxu0 0
        %792 = vmatpush1.bf16.xpose.msra.mxu0 0
        %793 = vmatprep.subr.bf16.mxu0 0
        %794 = vmatpush1.bf16.xpose.msra.mxu0 0
        %795 = vmatprep.subr.bf16.mxu0 0
        %796 = vmatpush1.bf16.xpose.msra.mxu0 0
        %797 = vmatprep.subr.bf16.mxu0 0
        %798 = vmatpush1.bf16.xpose.msra.mxu0 0
        %799 = vmatprep.subr.bf16.mxu0 0
        %800 = vmatpush1.bf16.xpose.msra.mxu0 0
        %801 = vmatprep.subr.bf16.mxu0 0
        %802 = vmatpush1.bf16.xpose.msra.mxu0 0
        %803 = vmatprep.subr.bf16.mxu0 0
        %804 = vmatpush1.bf16.xpose.msra.mxu0 0
        %805 = vmatprep.mubr.bf16.mxu0 0
        %806 = vmatmul.mubr.bf16.gmra.mrb[0].mxu0 %v768
        %v807 = vpop.f32.mrb[0].mxu0
        %v808 = vadd.f32 0.0, %v807
        %v809 = vpop.f32.mrb[0].mxu0
        %v810 = vpop.f32.mrb[0].mxu0
        %v811 = vpop.f32.mrb[0].mxu0
        %812 = vdwg.mxu0
        %v813 = vsel %vm542, %v808, -inf
        %814 = vmax.xlane.f32.xlu0 %v813
        %v815 = vpop.xlane.xlu0 %814
        %v816 = vsub.f32 %v808, %v815
        %v817 = vmul.f32 %v816, 1.442695
        %v818 = vpow.pop %v817
        %v819 = vsel %vm542, %v818, 0.0
        %820 = vadd.xlane.f32.xlu0 %v819
        %v821 = vpop.xlane.xlu0 %820
        %v822 = vrcp.pop %v821
        %v823 = vmul.f32 %v818, %v822
        %v824 = vpack.c.bf16 %v823, %v823
        %825 = vrot.lane.b32.xlu0 %v538, 48
        %v826 = vpop.permute.xlu0 %825
        %v828 = vsel %vm542, %v824, 0
        %v831 = vsel %vm606, %v826, 0
        %833 = vmatprep.subr.bf16.mxu0 0
        %834 = vmatpush1.bf16.msra.mxu0 %v831
        %835 = vmatprep.subr.bf16.mxu0 0
        %836 = vmatpush1.bf16.msra.mxu0 0
        %837 = vmatprep.subr.bf16.mxu0 0
        %838 = vmatpush1.bf16.msra.mxu0 0
        %839 = vmatprep.subr.bf16.mxu0 0
        %840 = vmatpush1.bf16.msra.mxu0 0
        %841 = vmatprep.subr.bf16.mxu0 0
        %842 = vmatpush1.bf16.msra.mxu0 0
        %843 = vmatprep.subr.bf16.mxu0 0
        %844 = vmatpush1.bf16.msra.mxu0 0
        %845 = vmatprep.subr.bf16.mxu0 0
        %846 = vmatpush1.bf16.msra.mxu0 0
        %847 = vmatprep.subr.bf16.mxu0 0
        %848 = vmatpush1.bf16.msra.mxu0 0
        %849 = vmatprep.subr.bf16.mxu0 0
        %850 = vmatpush1.bf16.msra.mxu0 0
        %851 = vmatprep.subr.bf16.mxu0 0
        %852 = vmatpush1.bf16.msra.mxu0 0
        %853 = vmatprep.subr.bf16.mxu0 0
        %854 = vmatpush1.bf16.msra.mxu0 0
        %855 = vmatprep.subr.bf16.mxu0 0
        %856 = vmatpush1.bf16.msra.mxu0 0
        %857 = vmatprep.subr.bf16.mxu0 0
        %858 = vmatpush1.bf16.msra.mxu0 0
        %859 = vmatprep.subr.bf16.mxu0 0
        %860 = vmatpush1.bf16.msra.mxu0 0
        %861 = vmatprep.subr.bf16.mxu0 0
        %862 = vmatpush1.bf16.msra.mxu0 0
        %863 = vmatprep.subr.bf16.mxu0 0
        %864 = vmatpush1.bf16.msra.mxu0 0
        %865 = vmatprep.mubr.bf16.mxu0 0
        %866 = vmatmul.mubr.bf16.gmra.mrb[0].mxu0 %v828
        %v867 = vpop.f32.mrb[0].mxu0
        %v868 = vadd.f32 0.0, %v867
        %v869 = vpop.f32.mrb[0].mxu0
        %v870 = vpop.f32.mrb[0].mxu0
        %v871 = vpop.f32.mrb[0].mxu0
        %872 = vdwg.mxu0
        %v873 = vpack.c.bf16 %v868, %v868
        %874 = vrot.lane.b32.xlu0 %v537, 104
        %v875 = vpop.permute.xlu0 %874
        %876 = vrot.lane.b32.xlu0 %v538, 72
        %v877 = vpop.permute.xlu0 %876
        %v879 = vsel %vm542, %v875, 0
        %v882 = vsel %vm542, %v877, 0
        %884 = vmatprep.subr.bf16.mxu0 0
        %885 = vmatpush1.bf16.xpose.msra.mxu0 %v882
        %886 = vmatprep.subr.bf16.mxu0 0
        %887 = vmatpush1.bf16.xpose.msra.mxu0 0
        %888 = vmatprep.subr.bf16.mxu0 0
        %889 = vmatpush1.bf16.xpose.msra.mxu0 0
        %890 = vmatprep.subr.bf16.mxu0 0
        %891 = vmatpush1.bf16.xpose.msra.mxu0 0
        %892 = vmatprep.subr.bf16.mxu0 0
        %893 = vmatpush1.bf16.xpose.msra.mxu0 0
        %894 = vmatprep.subr.bf16.mxu0 0
        %895 = vmatpush1.bf16.xpose.msra.mxu0 0
        %896 = vmatprep.subr.bf16.mxu0 0
        %897 = vmatpush1.bf16.xpose.msra.mxu0 0
        %898 = vmatprep.subr.bf16.mxu0 0
        %899 = vmatpush1.bf16.xpose.msra.mxu0 0
        %900 = vmatprep.subr.bf16.mxu0 0
        %901 = vmatpush1.bf16.xpose.msra.mxu0 0
        %902 = vmatprep.subr.bf16.mxu0 0
        %903 = vmatpush1.bf16.xpose.msra.mxu0 0
        %904 = vmatprep.subr.bf16.mxu0 0
        %905 = vmatpush1.bf16.xpose.msra.mxu0 0
        %906 = vmatprep.subr.bf16.mxu0 0
        %907 = vmatpush1.bf16.xpose.msra.mxu0 0
        %908 = vmatprep.subr.bf16.mxu0 0
        %909 = vmatpush1.bf16.xpose.msra.mxu0 0
        %910 = vmatprep.subr.bf16.mxu0 0
        %911 = vmatpush1.bf16.xpose.msra.mxu0 0
        %912 = vmatprep.subr.bf16.mxu0 0
        %913 = vmatpush1.bf16.xpose.msra.mxu0 0
        %914 = vmatprep.subr.bf16.mxu0 0
        %915 = vmatpush1.bf16.xpose.msra.mxu0 0
        %916 = vmatprep.mubr.bf16.mxu0 0
        %917 = vmatmul.mubr.bf16.gmra.mrb[0].mxu0 %v879
        %v918 = vpop.f32.mrb[0].mxu0
        %v919 = vadd.f32 0.0, %v918
        %v920 = vpop.f32.mrb[0].mxu0
        %v921 = vpop.f32.mrb[0].mxu0
        %v922 = vpop.f32.mrb[0].mxu0
        %923 = vdwg.mxu0
        %v924 = vsel %vm542, %v919, -inf
        %925 = vmax.xlane.f32.xlu0 %v924
        %v926 = vpop.xlane.xlu0 %925
        %v927 = vsub.f32 %v919, %v926
        %v928 = vmul.f32 %v927, 1.442695
        %v929 = vpow.pop %v928
        %v930 = vsel %vm542, %v929, 0.0
        %931 = vadd.xlane.f32.xlu0 %v930
        %v932 = vpop.xlane.xlu0 %931
        %v933 = vrcp.pop %v932
        %v934 = vmul.f32 %v929, %v933
        %v935 = vpack.c.bf16 %v934, %v934
        %936 = vrot.lane.b32.xlu0 %v538, 40
        %v937 = vpop.permute.xlu0 %936
        %v939 = vsel %vm542, %v935, 0
        %v942 = vsel %vm606, %v937, 0
        %944 = vmatprep.subr.bf16.mxu0 0
        %945 = vmatpush1.bf16.msra.mxu0 %v942
        %946 = vmatprep.subr.bf16.mxu0 0
        %947 = vmatpush1.bf16.msra.mxu0 0
        %948 = vmatprep.subr.bf16.mxu0 0
        %949 = vmatpush1.bf16.msra.mxu0 0
        %950 = vmatprep.subr.bf16.mxu0 0
        %951 = vmatpush1.bf16.msra.mxu0 0
        %952 = vmatprep.subr.bf16.mxu0 0
        %953 = vmatpush1.bf16.msra.mxu0 0
        %954 = vmatprep.subr.bf16.mxu0 0
        %955 = vmatpush1.bf16.msra.mxu0 0
        %956 = vmatprep.subr.bf16.mxu0 0
        %957 = vmatpush1.bf16.msra.mxu0 0
        %958 = vmatprep.subr.bf16.mxu0 0
        %959 = vmatpush1.bf16.msra.mxu0 0
        %960 = vmatprep.subr.bf16.mxu0 0
        %961 = vmatpush1.bf16.msra.mxu0 0
        %962 = vmatprep.subr.bf16.mxu0 0
        %963 = vmatpush1.bf16.msra.mxu0 0
        %964 = vmatprep.subr.bf16.mxu0 0
        %965 = vmatpush1.bf16.msra.mxu0 0
        %966 = vmatprep.subr.bf16.mxu0 0
        %967 = vmatpush1.bf16.msra.mxu0 0
        %968 = vmatprep.subr.bf16.mxu0 0
        %969 = vmatpush1.bf16.msra.mxu0 0
        %970 = vmatprep.subr.bf16.mxu0 0
        %971 = vmatpush1.bf16.msra.mxu0 0
        %972 = vmatprep.subr.bf16.mxu0 0
        %973 = vmatpush1.bf16.msra.mxu0 0
        %974 = vmatprep.subr.bf16.mxu0 0
        %975 = vmatpush1.bf16.msra.mxu0 0
        %976 = vmatprep.mubr.bf16.mxu0 0
        %977 = vmatmul.mubr.bf16.gmra.mrb[0].mxu0 %v939
        %v978 = vpop.f32.mrb[0].mxu0
        %v979 = vadd.f32 0.0, %v978
        %v980 = vpop.f32.mrb[0].mxu0
        %v981 = vpop.f32.mrb[0].mxu0
        %v982 = vpop.f32.mrb[0].mxu0
        %983 = vdwg.mxu0
        %v984 = vpack.c.bf16 %v979, %v979
        %986 = vrot.lane.b32.xlu0 %v762, 8
        %v987 = vpop.permute.xlu0 %986
        %989 = vrot.lane.b32.xlu0 %v873, 16
        %v990 = vpop.permute.xlu0 %989
        %992 = vrot.lane.b32.xlu0 %v984, 24
        %v993 = vpop.permute.xlu0 %992
        %v996 = vsel %vm542, %v650, %v987
        %vm997 = vcmask 130048
        %v999 = vsel %vm997, %v996, %v990
        %vm1000 = vcmask 195584
        %v1002 = vsel %vm1000, %v999, %v993
        %v1003 = vld [vmem:[%s5] sm:$0xf]
        %v1004 = vld [vmem:[%s5 + $0x4] sm:$0xf]
        %v1005 = vld [vmem:[%s5 + $0x8] sm:$0xf]
        %v1006 = vld [vmem:[%s5 + $0xc] sm:$0xf]
        %v1011 = vunpack.c.l.b16 %v1003
        %v1012 = vunpack.c.l.b16 %v1004
        %v1013 = vunpack.c.l.b16 %v1005
        %v1014 = vunpack.c.l.b16 %v1006
        %v1015 = vpack.c.b16 %v1012, %v1011
        %v1016 = vpack.c.b16 %v1014, %v1013
        %v1019 = vsel %vm440, %v1002, 0
        %1021 = vmatprep.subr.bf16.mxu0 0
        %1022 = vmatpush1.bf16.msra.mxu0 %v1015
        %1023 = vmatprep.subr.bf16.mxu0 0
        %1024 = vmatpush1.bf16.msra.mxu0 %v1016
        %1025 = vmatprep.subr.bf16.mxu0 0
        %1026 = vmatpush1.bf16.msra.mxu0 0
        %1027 = vmatprep.subr.bf16.mxu0 0
        %1028 = vmatpush1.bf16.msra.mxu0 0
        %1029 = vmatprep.subr.bf16.mxu0 0
        %1030 = vmatpush1.bf16.msra.mxu0 0
        %1031 = vmatprep.subr.bf16.mxu0 0
        %1032 = vmatpush1.bf16.msra.mxu0 0
        %1033 = vmatprep.subr.bf16.mxu0 0
        %1034 = vmatpush1.bf16.msra.mxu0 0
        %1035 = vmatprep.subr.bf16.mxu0 0
        %1036 = vmatpush1.bf16.msra.mxu0 0
        %1037 = vmatprep.subr.bf16.mxu0 0
        %1038 = vmatpush1.bf16.msra.mxu0 0
        %1039 = vmatprep.subr.bf16.mxu0 0
        %1040 = vmatpush1.bf16.msra.mxu0 0
        %1041 = vmatprep.subr.bf16.mxu0 0
        %1042 = vmatpush1.bf16.msra.mxu0 0
        %1043 = vmatprep.subr.bf16.mxu0 0
        %1044 = vmatpush1.bf16.msra.mxu0 0
        %1045 = vmatprep.subr.bf16.mxu0 0
        %1046 = vmatpush1.bf16.msra.mxu0 0
        %1047 = vmatprep.subr.bf16.mxu0 0
        %1048 = vmatpush1.bf16.msra.mxu0 0
        %1049 = vmatprep.subr.bf16.mxu0 0
        %1050 = vmatpush1.bf16.msra.mxu0 0
        %1051 = vmatprep.subr.bf16.mxu0 0
        %1052 = vmatpush1.bf16.msra.mxu0 0
        %1053 = vmatprep.mubr.bf16.mxu0 0
        %1054 = vmatmul.mubr.bf16.gmra.mrb[0].mxu0 %v1019
        %v1055 = vpop.f32.mrb[0].mxu0
        %v1056 = vadd.f32 0.0, %v1055
        %v1057 = vpop.f32.mrb[0].mxu0
        %v1058 = vpop.f32.mrb[0].mxu0
        %v1059 = vpop.f32.mrb[0].mxu0
        %1060 = vdwg.mxu0
        %v1061 = vadd.f32 %v437, %v1056
        %v1062 = vld [vmem:[%s6] sm:$0x1]
        %v1064 = vlaneseq
        %v1065 = vshrl.u32 %v1064, 7
        %v1066 = vsub.s32 0, %v1065
        %v1067 = vrot.slane %v1062, %v1066
        %v1069 = vadd.f32 %v1061, %v1067
        %v1070 = vld [vmem:[%s7] sm:$0x1]
        %v1071 = vld [vmem:[%s8] sm:$0x1]
        %v1072 = vsel %vm440, %v1069, 0.0
        %1073 = vadd.xlane.f32.xlu0 %v1072
        %v1074 = vpop.xlane.xlu0 %1073
        %v1075 = vmul.f32 %v1074, %v444
        %v1076 = vsub.f32 %v1069, %v1075
        %v1077 = vmul.f32 %v1076, %v1076
        %v1078 = vsel %vm440, %v1077, 0.0
        %1079 = vadd.xlane.f32.xlu0 %v1078
        %v1080 = vpop.xlane.xlu0 %1079
        %v1081 = vmul.f32 %v1080, %v444
        %v1082 = vadd.f32 %v1081, 1e-05
        %v1083 = vrsqrt.pop %v1082
        %v1084 = vmul.f32 %v1076, %v1083
        %v1086 = vlaneseq
        %v1087 = vshrl.u32 %v1086, 7
        %v1088 = vsub.s32 0, %v1087
        %v1089 = vrot.slane %v1070, %v1088
        %v1091 = vmul.f32 %v1084, %v1089
        %v1093 = vlaneseq
        %v1094 = vshrl.u32 %v1093, 7
        %v1095 = vsub.s32 0, %v1094
        %v1096 = vrot.slane %v1071, %v1095
        %v1098 = vadd.f32 %v1091, %v1096
        %v1099 = vld [vmem:[%s9] sm:$0xf]
        %v1100 = vld [vmem:[%s9 + $0x4] sm:$0xf]
        %v1101 = vld [vmem:[%s9 + $0x8] sm:$0xf]
        %v1102 = vld [vmem:[%s9 + $0xc] sm:$0xf]
        %v1103 = vld [vmem:[%s10] sm:$0x1]
        %v1104 = vld [vmem:[%s11] sm:$0xf]
        %v1105 = vld [vmem:[%s11 + $0x4] sm:$0xf]
        %v1106 = vld [vmem:[%s11 + $0x8] sm:$0xf]
        %v1107 = vld [vmem:[%s11 + $0xc] sm:$0xf]
        %v1108 = vld [vmem:[%s11 + $0x10] sm:$0xf]
        %v1109 = vld [vmem:[%s11 + $0x14] sm:$0xf]
        %v1110 = vld [vmem:[%s11 + $0x18] sm:$0xf]
        %v1111 = vld [vmem:[%s11 + $0x1c] sm:$0xf]
        %v1112 = vld [vmem:[%s11 + $0x20] sm:$0xf]
        %v1113 = vld [vmem:[%s11 + $0x24] sm:$0xf]
        %v1114 = vld [vmem:[%s11 + $0x28] sm:$0xf]
        %v1115 = vld [vmem:[%s11 + $0x2c] sm:$0xf]
        %v1116 = vld [vmem:[%s11 + $0x30] sm:$0xf]
        %v1117 = vld [vmem:[%s11 + $0x34] sm:$0xf]
        %v1118 = vld [vmem:[%s11 + $0x38] sm:$0xf]
        %v1119 = vld [vmem:[%s11 + $0x3c] sm:$0xf]
        %v1120 = vld [vmem:[%s12] sm:$0x1]
        %v1121 = vpack.c.bf16 %v1098, %v1098
        %v1123 = vlaneseq
        %v1124 = vshrl.u32 %v1123, 7
        %v1125 = vsub.s32 0, %v1124
        %v1126 = vrot.slane %v1103, %v1125
        %v1132 = vunpack.c.l.b16 %v1099
        %v1133 = vunpack.c.l.b16 %v1100
        %v1134 = vunpack.c.l.b16 %v1101
        %v1135 = vunpack.c.l.b16 %v1102
        %v1136 = vpack.c.b16 %v1133, %v1132
        %v1137 = vpack.c.b16 %v1135, %v1134
        %v1141 = vsel %vm440, %v1121, 0
        %1143 = vmatprep.subr.bf16.mxu0 0
        %1144 = vmatpush1.bf16.msra.mxu0 %v1136
        %1145 = vmatprep.subr.bf16.mxu0 0
        %1146 = vmatpush1.bf16.msra.mxu0 %v1137
        %1147 = vmatprep.subr.bf16.mxu0 0
        %1148 = vmatpush1.bf16.msra.mxu0 0
        %1149 = vmatprep.subr.bf16.mxu0 0
        %1150 = vmatpush1.bf16.msra.mxu0 0
        %1151 = vmatprep.subr.bf16.mxu0 0
        %1152 = vmatpush1.bf16.msra.mxu0 0
        %1153 = vmatprep.subr.bf16.mxu0 0
        %1154 = vmatpush1.bf16.msra.mxu0 0
        %1155 = vmatprep.subr.bf16.mxu0 0
        %1156 = vmatpush1.bf16.msra.mxu0 0
        %1157 = vmatprep.subr.bf16.mxu0 0
        %1158 = vmatpush1.bf16.msra.mxu0 0
        %1159 = vmatprep.subr.bf16.mxu0 0
        %1160 = vmatpush1.bf16.msra.mxu0 0
        %1161 = vmatprep.subr.bf16.mxu0 0
        %1162 = vmatpush1.bf16.msra.mxu0 0
        %1163 = vmatprep.subr.bf16.mxu0 0
        %1164 = vmatpush1.bf16.msra.mxu0 0
        %1165 = vmatprep.subr.bf16.mxu0 0
        %1166 = vmatpush1.bf16.msra.mxu0 0
        %1167 = vmatprep.subr.bf16.mxu0 0
        %1168 = vmatpush1.bf16.msra.mxu0 0
        %1169 = vmatprep.subr.bf16.mxu0 0
        %1170 = vmatpush1.bf16.msra.mxu0 0
        %1171 = vmatprep.subr.bf16.mxu0 0
        %1172 = vmatpush1.bf16.msra.mxu0 0
        %1173 = vmatprep.subr.bf16.mxu0 0
        %1174 = vmatpush1.bf16.msra.mxu0 0
        %1175 = vmatprep.mubr.bf16.mxu0 0
        %1176 = vmatmul.mubr.bf16.gmra.mrb[0].mxu0 %v1141
        %v1177 = vpop.f32.mrb[0].mxu0
        %v1178 = vadd.f32 %v1126, %v1177
        %v1179 = vpop.f32.mrb[0].mxu0
        %v1180 = vpop.f32.mrb[0].mxu0
        %v1181 = vpop.f32.mrb[0].mxu0
        %1182 = vdwg.mxu0
        %v1183 = vmul.f32 %v1178, 0.5
        %v1184 = vmul.f32 %v1178, 0.044715
        %v1185 = vmul.f32 %v1184, %v1178
        %v1186 = vmul.f32 %v1185, %v1178
        %v1187 = vadd.f32 %v1178, %v1186
        %v1188 = vmul.f32 %v1187, 0.7978846
        %v1189 = vtanh.pop %v1188
        %v1190 = vadd.f32 %v1189, 1.0
        %v1191 = vmul.f32 %v1183, %v1190
        %v1192 = vpack.c.bf16 %v1191, %v1191
        %v1194 = vlaneseq
        %v1195 = vshrl.u32 %v1194, 7
        %v1196 = vsub.s32 0, %v1195
        %v1197 = vrot.slane %v1120, %v1196
        %v1215 = vunpack.c.l.b16 %v1104
        %v1216 = vunpack.c.l.b16 %v1105
        %v1217 = vunpack.c.l.b16 %v1106
        %v1218 = vunpack.c.l.b16 %v1107
        %v1219 = vunpack.c.l.b16 %v1108
        %v1220 = vunpack.c.l.b16 %v1109
        %v1221 = vunpack.c.l.b16 %v1110
        %v1222 = vunpack.c.l.b16 %v1111
        %v1223 = vunpack.c.l.b16 %v1112
        %v1224 = vunpack.c.l.b16 %v1113
        %v1225 = vunpack.c.l.b16 %v1114
        %v1226 = vunpack.c.l.b16 %v1115
        %v1227 = vunpack.c.l.b16 %v1116
        %v1228 = vunpack.c.l.b16 %v1117
        %v1229 = vunpack.c.l.b16 %v1118
        %v1230 = vunpack.c.l.b16 %v1119
        %v1231 = vpack.c.b16 %v1216, %v1215
        %v1232 = vpack.c.b16 %v1218, %v1217
        %v1233 = vpack.c.b16 %v1220, %v1219
        %v1234 = vpack.c.b16 %v1222, %v1221
        %v1235 = vpack.c.b16 %v1224, %v1223
        %v1236 = vpack.c.b16 %v1226, %v1225
        %v1237 = vpack.c.b16 %v1228, %v1227
        %v1238 = vpack.c.b16 %v1230, %v1229
        %1247 = vmatprep.subr.bf16.mxu0 0
        %1248 = vmatpush1.bf16.msra.mxu0 %v1231
        %1249 = vmatprep.subr.bf16.mxu0 0
        %1250 = vmatpush1.bf16.msra.mxu0 %v1232
        %1251 = vmatprep.subr.bf16.mxu0 0
        %1252 = vmatpush1.bf16.msra.mxu0 %v1233
        %1253 = vmatprep.subr.bf16.mxu0 0
        %1254 = vmatpush1.bf16.msra.mxu0 %v1234
        %1255 = vmatprep.subr.bf16.mxu0 0
        %1256 = vmatpush1.bf16.msra.mxu0 %v1235
        %1257 = vmatprep.subr.bf16.mxu0 0
        %1258 = vmatpush1.bf16.msra.mxu0 %v1236
        %1259 = vmatprep.subr.bf16.mxu0 0
        %1260 = vmatpush1.bf16.msra.mxu0 %v1237
        %1261 = vmatprep.subr.bf16.mxu0 0
        %1262 = vmatpush1.bf16.msra.mxu0 %v1238
        %1263 = vmatprep.subr.bf16.mxu0 0
        %1264 = vmatpush1.bf16.msra.mxu0 0
        %1265 = vmatprep.subr.bf16.mxu0 0
        %1266 = vmatpush1.bf16.msra.mxu0 0
        %1267 = vmatprep.subr.bf16.mxu0 0
        %1268 = vmatpush1.bf16.msra.mxu0 0
        %1269 = vmatprep.subr.bf16.mxu0 0
        %1270 = vmatpush1.bf16.msra.mxu0 0
        %1271 = vmatprep.subr.bf16.mxu0 0
        %1272 = vmatpush1.bf16.msra.mxu0 0
        %1273 = vmatprep.subr.bf16.mxu0 0
        %1274 = vmatpush1.bf16.msra.mxu0 0
        %1275 = vmatprep.subr.bf16.mxu0 0
        %1276 = vmatpush1.bf16.msra.mxu0 0
        %1277 = vmatprep.subr.bf16.mxu0 0
        %1278 = vmatpush1.bf16.msra.mxu0 0
        %1279 = vmatprep.mubr.bf16.mxu0 0
        %1280 = vmatmul.mubr.bf16.gmra.mrb[0].mxu0 %v1192
        %v1281 = vpop.f32.mrb[0].mxu0
        %v1282 = vadd.f32 %v1197, %v1281
        %v1283 = vpop.f32.mrb[0].mxu0
        %v1284 = vpop.f32.mrb[0].mxu0
        %v1285 = vpop.f32.mrb[0].mxu0
        %1286 = vdwg.mxu0
        %v1287 = vadd.f32 %v1069, %v1282
        %1288 = vst.msk [vmem:[%s431] sm:$0xff] %vm440, %v1287
        %s1289 = sand.u32 %s313, 1
        %s1290 = scalar_lea.sflag [#allocation3], %s1289
        %s1291 = sand.u32 %s313, 1
        %s1292 = smul.addr %s1291, 8
        %s1293 = scalar_lea.vmem [#allocation2], %s1292
        // Predicated region
        $region73: #{tpu_custom_call.1} parent=71 // pred_check
          %p1294 = pneg %p323
        $region74: #{tpu_custom_call.1} parent=71 // pred_check_branch
          %1296 = sbr.rel (%p1294) target = $region76
        $region75: #{tpu_custom_call.1} parent=71 // pred_region
          %s1298 = ssub.s32 128, 128
          %1299 = vsyncadd %s1290, %s1298
          %s1300 = smul.addr %s27, 128
          %s1301 = scalar_lea.hbm %s13, %s1300
          %s1303 = sshll.u32 %s1293, 4
          %s1304 = int_to_ptr.vmem [resolvable:$true] %s1303
          %1306 = dma.vmem_to_hbm [thread:$0]  %s1304, 128, %s1301, %s1290
        $region76: #{tpu_custom_call.1} parent=71 // pred_fallthru
          _
      $region72: #{tpu_custom_call.1} parent=5 // pred_fallthru
        _
      %p1307 = scmp.le.s32.totalorder 2, %s22
      // Predicated region
      $region77: #{tpu_custom_call.1} parent=5 // pred_check
        %p1308 = pneg %p1307
      $region78: #{tpu_custom_call.1} parent=5 // pred_check_branch
        %1310 = sbr.rel (%p1308) target = $region80
      $region79: #{tpu_custom_call.1} parent=5 // pred_region
        %s1311 = ssub.s32 %s22, 2
        // Predicated region
        $region81: #{tpu_custom_call.1} parent=79 // pred_check
          %p1312 = pneg %p329
        $region82: #{tpu_custom_call.1} parent=79 // pred_check_branch
          %1314 = sbr.rel (%p1312) target = $region84
        $region83: #{tpu_custom_call.1} parent=79 // pred_region
          %s1315 = sand.u32 %s314, 1
          %s1316 = scalar_lea.sflag [#allocation3], %s1315
          %s1317 = sand.u32 %s314, 1
          %s1318 = smul.addr %s1317, 8
          %s1319 = scalar_lea.vmem [#allocation2], %s1318
          %1320 = dma.done %s1316, 128
        $region84: #{tpu_custom_call.1} parent=79 // pred_fallthru
          _
      $region80: #{tpu_custom_call.1} parent=5 // pred_fallthru
        _
    $region6: #{tpu_custom_call.1} parent=1 // loop_footer
      %s26 = sadd.s32 1, %s22
    $region7: #{tpu_custom_call.1} parent=1 // loop_footer_branch
      %21 = sbr.rel target = $region3
    $region8: #{tpu_custom_call.1} parent=1 // loop_exit
      _
    %1321 = vsyncpa [#allocation3], 1
    %s1322 = scalar_lea.sflag [#allocation3], 1
    %1323 = vsyncpa %s1322, 1

</llo_original>
